<compile_context>
chip_gen: v7x
topology: tpu7x:2x2x1
jax: 0.10.0
libtpu: 0.0.40
codegen_flags: <defaults>
</compile_context>

<pallas_src>
import jax
import jax.numpy as jnp
from jax.experimental import pallas as pl
from jax.experimental.pallas import tpu as pltpu

HIDDEN = 256
OUT_PAD = 128  # lane-dense padded width of the fc3 output


def _round_up(n, m):
    return ((n + m - 1) // m) * m


def soft_q_kernel(x_ref, z_ref, a_ref,
                  w1x_ref, w1z_ref, w1a_ref, b1_ref,
                  w2_ref, b2_ref, w3_ref, b3_ref, o_ref):
    """Fused 3-layer MLP for one (critic, batch-tile) grid point.

    Matmuls run on the MXU with bf16 operands / f32 accumulation; bias adds and
    ReLU run in f32 on the VPU. fc1 is split into three partial matmuls so the
    host-side concat of [x, z, a] is never materialized.
    """
    bf16 = jnp.bfloat16
    f32 = jnp.float32

    xb = x_ref[...].astype(bf16)
    zb = z_ref[...].astype(bf16)
    ab = a_ref[...].astype(bf16)

    h1 = jnp.dot(xb, w1x_ref[0], preferred_element_type=f32)
    h1 = h1 + jnp.dot(zb, w1z_ref[0], preferred_element_type=f32)
    h1 = h1 + jnp.dot(ab, w1a_ref[0], preferred_element_type=f32)
    h1 = jnp.maximum(h1 + b1_ref[0], 0.0)                       # (TM, 256) f32

    h2 = jnp.dot(h1.astype(bf16), w2_ref[0], preferred_element_type=f32)
    h2 = jnp.maximum(h2 + b2_ref[0], 0.0)                       # (TM, 256) f32

    out = jnp.dot(h2.astype(bf16), w3_ref[0], preferred_element_type=f32)
    o_ref[0] = out + b3_ref[0]                                  # (TM, 128) lane-dense


def prepare_params(params, obs_dim, skill_dim):
    """Convert PyTorch-style params to the kernel layout.

    w1 is split per input stream (x/z/a) and cast to bf16; w2 cast to bf16;
    w3/b3 are zero-padded to OUT_PAD lanes so the output store is lane-dense.
    """
    w1, b1, w2, b2, w3, b3 = params
    w1 = w1.astype(jnp.bfloat16)
    w1x = w1[:obs_dim]
    w1z = w1[obs_dim:obs_dim + skill_dim]
    w1a = w1[obs_dim + skill_dim:]
    w3p = jnp.pad(w3.astype(jnp.bfloat16), ((0, 0), (0, OUT_PAD - w3.shape[1])))
    b3p = jnp.pad(b3.astype(jnp.float32), ((0, 0), (0, OUT_PAD - b3.shape[1])))
    return (w1x, w1z, w1a, b1.astype(jnp.float32),
            w2.astype(jnp.bfloat16), b2.astype(jnp.float32), w3p, b3p)


def soft_q_forward_fused(x, z, a, params_list, *, tile_m=256):
    """Evaluate N SoftQNetworks (e.g. SAC's twin critics) in one pallas_call.

    Returns (N, B, 1) float32 Q-values.
    """
    assert tile_m % 8 == 0, "tile_m must be a multiple of 8 (sublane alignment)"
    x = x.astype(jnp.float32)
    z = z.astype(jnp.float32)
    a = a.astype(jnp.float32)
    B, obs_dim = x.shape
    skill_dim = z.shape[1]
    act_dim = a.shape[1]
    N = len(params_list)

    prepped = [prepare_params(p, obs_dim, skill_dim) for p in params_list]
    w1x, w1z, w1a, b1, w2, b2, w3p, b3p = [jnp.stack(t) for t in zip(*prepped)]
    H = w2.shape[-1]

    # Batch tiling: the kernel is launch/step-overhead bound at SAC batch sizes,
    # so use the biggest batch tile that fits (default 256 rows); small batches
    # collapse to a single 8-row-aligned tile.
    TM = min(tile_m, _round_up(B, 8))
    Bp = _round_up(B, TM)
    if Bp != B:
        pad2 = lambda t: jnp.pad(t, ((0, Bp - B), (0, 0)))
        x, z, a = pad2(x), pad2(z), pad2(a)
    n_btiles = Bp // TM

    act_spec = lambda d: pl.BlockSpec((TM, d), lambda n, i: (i, 0))
    wgt_spec = lambda r, c: pl.BlockSpec((1, r, c), lambda n, i: (n, 0, 0))

    out = pl.pallas_call(
        soft_q_kernel,
        out_shape=jax.ShapeDtypeStruct((N, Bp, OUT_PAD), jnp.float32),
        grid=(N, n_btiles),            # batch tiles innermost -> weights stay resident
        in_specs=[
            act_spec(obs_dim),              # x
            act_spec(skill_dim),            # z
            act_spec(act_dim),              # a
            wgt_spec(obs_dim, H),           # w1x
            wgt_spec(skill_dim, H),         # w1z
            wgt_spec(act_dim, H),           # w1a
            wgt_spec(1, H),                 # b1
            wgt_spec(H, H),                 # w2
            wgt_spec(1, H),                 # b2
            wgt_spec(H, OUT_PAD),           # w3 (zero-padded to 128 lanes)
            wgt_spec(1, OUT_PAD),           # b3 (zero-padded to 128 lanes)
        ],
        out_specs=pl.BlockSpec((1, TM, OUT_PAD), lambda n, i: (n, i, 0)),
        compiler_params=pltpu.CompilerParams(
            dimension_semantics=("parallel", "parallel")),
    )(x, z, a, w1x, w1z, w1a, b1, w2, b2, w3p, b3p)

    return out[:, :B, :1]


def soft_q_forward(x, z, a, params, *, tile_m=256):
    """Single-critic convenience wrapper; returns (B, 1)."""
    return soft_q_forward_fused(x, z, a, [params], tile_m=tile_m)[0]


def init_params(key, obs_dim, act_dim, nb_skill, hidden=HIDDEN):
    """Deterministic synthetic parameters (PyTorch-Linear-like uniform init).

    Weights are stored transposed as (in_features, out_features) so the forward
    computes x @ W + b == PyTorch's x @ W_t.T + b.
    """
    in_dim = obs_dim + act_dim + nb_skill

    def linear(k, fan_in, fan_out):
        kw, kb = jax.random.split(k)
        bound = 1.0 / jnp.sqrt(fan_in)
        w = jax.random.uniform(kw, (fan_in, fan_out), jnp.float32, -bound, bound)
        b = jax.random.uniform(kb, (1, fan_out), jnp.float32, -bound, bound)
        return w, b

    k1, k2, k3 = jax.random.split(key, 3)
    w1, b1 = linear(k1, in_dim, hidden)
    w2, b2 = linear(k2, hidden, hidden)
    w3, b3 = linear(k3, hidden, 1)
    return (w1, b1, w2, b2, w3, b3)


# ----------------------------- references --------------------------------- #

def ref_forward_f32(x, z, a, params):
    """Pure-f32 PyTorch-equivalent reference."""
    w1, b1, w2, b2, w3, b3 = params
    h = jnp.concatenate([x, z, a], axis=1)
    h = jnp.maximum(h @ w1 + b1, 0.0)
    h = jnp.maximum(h @ w2 + b2, 0.0)
    return h @ w3 + b3


def ref_forward_kernel_precision(x, z, a, params, obs_dim, skill_dim):
    """Pure-JAX reference mirroring the kernel's numerics (bf16 MXU, f32 acc)."""
    w1, b1, w2, b2, w3, b3 = params
    bf16, f32 = jnp.bfloat16, jnp.float32
    w1x, w1z, w1a = (w1[:obs_dim], w1[obs_dim:obs_dim + skill_dim],
                     w1[obs_dim + skill_dim:])
    h1 = (jnp.dot(x.astype(bf16), w1x.astype(bf16), preferred_element_type=f32)
          + jnp.dot(z.astype(bf16), w1z.astype(bf16), preferred_element_type=f32)
          + jnp.dot(a.astype(bf16), w1a.astype(bf16), preferred_element_type=f32))
    h1 = jnp.maximum(h1 + b1, 0.0)
    h2 = jnp.dot(h1.astype(bf16), w2.astype(bf16), preferred_element_type=f32)
    h2 = jnp.maximum(h2 + b2, 0.0)
    return jnp.dot(h2.astype(bf16), w3.astype(bf16), preferred_element_type=f32) + b3


if __name__ == "__main__":
    key = jax.random.PRNGKey(0)
    kx, kz, ka, kp1, kp2 = jax.random.split(key, 5)

    obs_dim = 16     # env.single_observation_space.shape -> prod = 16
    act_dim = 4      # env.single_action_space.shape -> prod = 4
    nb_skill = 8     # skill embedding size

    # Twin critics (qf1 / qf2) fused into one pallas_call.
    params1 = init_params(kp1, obs_dim, act_dim, nb_skill)
    params2 = init_params(kp2, obs_dim, act_dim, nb_skill)

    # ---- Test 1: small batch, twin critics, single batch tile ------------- #
    B = 64
    x = jax.random.normal(kx, (B, obs_dim), jnp.float32)
    z = jax.random.normal(kz, (B, nb_skill), jnp.float32)
    a = jax.random.normal(ka, (B, act_dim), jnp.float32)

    q_both = soft_q_forward_fused(x, z, a, [params1, params2])   # (2, B, 1)
    jax.block_until_ready(q_both)
    assert q_both.shape == (2, B, 1)

    for i, p in enumerate((params1, params2)):
        ref_match = ref_forward_kernel_precision(x, z, a, p, obs_dim, nb_skill)
        ref_f32 = ref_forward_f32(x, z, a, p)
        assert jnp.allclose(q_both[i], ref_match, atol=1e-3, rtol=1e-3), \
            f"critic {i}: mismatch vs precision-matched reference"
        assert jnp.allclose(q_both[i], ref_f32, atol=5e-2, rtol=5e-2), \
            f"critic {i}: mismatch vs f32 reference"

    # ---- Test 2: ragged batch, multiple batch tiles, single critic -------- #
    B2 = 150  # not a multiple of the 64-row tile -> exercises padding + tiling
    x2 = jax.random.normal(kx, (B2, obs_dim), jnp.float32)
    z2 = jax.random.normal(kz, (B2, nb_skill), jnp.float32)
    a2 = jax.random.normal(ka, (B2, act_dim), jnp.float32)

    q_single = soft_q_forward(x2, z2, a2, params1, tile_m=64)
    jax.block_until_ready(q_single)
    assert q_single.shape == (B2, 1)
    ref2 = ref_forward_kernel_precision(x2, z2, a2, params1, obs_dim, nb_skill)
    assert jnp.allclose(q_single, ref2, atol=1e-3, rtol=1e-3), \
        "ragged-batch single critic mismatch"

    print("KERNEL_OK")
</pallas_src>

<mosaic_0001>
module attributes {stable_mosaic.version = 11 : i64} {
  func.func @soft_q_kernel(%arg0: i32, %arg1: i32, %arg2: memref<64x16xf32, #tpu.memory_space<vmem>>, %arg3: memref<64x8xf32, #tpu.memory_space<vmem>>, %arg4: memref<64x4xf32, #tpu.memory_space<vmem>>, %arg5: memref<1x16x256xbf16, #tpu.memory_space<vmem>>, %arg6: memref<1x8x256xbf16, #tpu.memory_space<vmem>>, %arg7: memref<1x4x256xbf16, #tpu.memory_space<vmem>>, %arg8: memref<1x1x256xf32, #tpu.memory_space<vmem>>, %arg9: memref<1x256x256xbf16, #tpu.memory_space<vmem>>, %arg10: memref<1x1x256xf32, #tpu.memory_space<vmem>>, %arg11: memref<1x256x128xbf16, #tpu.memory_space<vmem>>, %arg12: memref<1x1x128xf32, #tpu.memory_space<vmem>>, %arg13: memref<1x64x128xf32, #tpu.memory_space<vmem>>) attributes {dimension_semantics = [#tpu.dimension_semantics<parallel>, #tpu.dimension_semantics<parallel>], iteration_bounds = array<i64: 2, 1>, scalar_prefetch = 0 : i64, scratch_operands = 0 : i64, tpu.core_type = #tpu.core_type<tc>, window_params = [{transform_indices = @transform_0, window_bounds = array<i64: 64, 16>}, {transform_indices = @transform_1, window_bounds = array<i64: 64, 8>}, {transform_indices = @transform_2, window_bounds = array<i64: 64, 4>}, {transform_indices = @transform_3, window_bounds = array<i64: 1, 16, 256>}, {transform_indices = @transform_4, window_bounds = array<i64: 1, 8, 256>}, {transform_indices = @transform_5, window_bounds = array<i64: 1, 4, 256>}, {transform_indices = @transform_6, window_bounds = array<i64: 1, 1, 256>}, {transform_indices = @transform_7, window_bounds = array<i64: 1, 256, 256>}, {transform_indices = @transform_8, window_bounds = array<i64: 1, 1, 256>}, {transform_indices = @transform_9, window_bounds = array<i64: 1, 256, 128>}, {transform_indices = @transform_10, window_bounds = array<i64: 1, 1, 128>}, {transform_indices = @transform_11, window_bounds = array<i64: 1, 64, 128>}]} {
    %c0 = arith.constant 0 : index
    %c0_0 = arith.constant 0 : index
    %0 = vector.load %arg2[%c0, %c0_0] : memref<64x16xf32, #tpu.memory_space<vmem>>, vector<64x16xf32>
    %1 = arith.truncf %0 : vector<64x16xf32> to vector<64x16xbf16>
    %c0_1 = arith.constant 0 : index
    %c0_2 = arith.constant 0 : index
    %2 = vector.load %arg3[%c0_1, %c0_2] : memref<64x8xf32, #tpu.memory_space<vmem>>, vector<64x8xf32>
    %3 = arith.truncf %2 : vector<64x8xf32> to vector<64x8xbf16>
    %c0_3 = arith.constant 0 : index
    %c0_4 = arith.constant 0 : index
    %4 = vector.load %arg4[%c0_3, %c0_4] : memref<64x4xf32, #tpu.memory_space<vmem>>, vector<64x4xf32>
    %5 = arith.truncf %4 : vector<64x4xf32> to vector<64x4xbf16>
    %c0_5 = arith.constant 0 : index
    %c0_6 = arith.constant 0 : index
    %c0_7 = arith.constant 0 : index
    %6 = vector.load %arg5[%c0_5, %c0_6, %c0_7] : memref<1x16x256xbf16, #tpu.memory_space<vmem>>, vector<1x16x256xbf16>
    %7 = vector.shape_cast %6 : vector<1x16x256xbf16> to vector<16x256xbf16>
    %cst = arith.constant dense<0.000000e+00> : vector<64x256xf32>
    %8 = tpu.matmul %1, %7, %cst {dimension_numbers = #tpu.dot_dimension_numbers<[1], [0], [0], [1], [0, 0, 1, 1], [], []>} : vector<64x16xbf16>, vector<16x256xbf16>, vector<64x256xf32> -> vector<64x256xf32>
    %c0_8 = arith.constant 0 : index
    %c0_9 = arith.constant 0 : index
    %c0_10 = arith.constant 0 : index
    %9 = vector.load %arg6[%c0_8, %c0_9, %c0_10] : memref<1x8x256xbf16, #tpu.memory_space<vmem>>, vector<1x8x256xbf16>
    %10 = vector.shape_cast %9 : vector<1x8x256xbf16> to vector<8x256xbf16>
    %cst_11 = arith.constant dense<0.000000e+00> : vector<64x256xf32>
    %11 = tpu.matmul %3, %10, %cst_11 {dimension_numbers = #tpu.dot_dimension_numbers<[1], [0], [0], [1], [0, 0, 1, 1], [], []>} : vector<64x8xbf16>, vector<8x256xbf16>, vector<64x256xf32> -> vector<64x256xf32>
    %12 = arith.addf %8, %11 : vector<64x256xf32>
    %c0_12 = arith.constant 0 : index
    %c0_13 = arith.constant 0 : index
    %c0_14 = arith.constant 0 : index
    %13 = vector.load %arg7[%c0_12, %c0_13, %c0_14] : memref<1x4x256xbf16, #tpu.memory_space<vmem>>, vector<1x4x256xbf16>
    %14 = vector.shape_cast %13 : vector<1x4x256xbf16> to vector<4x256xbf16>
    %cst_15 = arith.constant dense<0.000000e+00> : vector<64x256xf32>
    %15 = tpu.matmul %5, %14, %cst_15 {dimension_numbers = #tpu.dot_dimension_numbers<[1], [0], [0], [1], [0, 0, 1, 1], [], []>} : vector<64x4xbf16>, vector<4x256xbf16>, vector<64x256xf32> -> vector<64x256xf32>
    %16 = arith.addf %12, %15 : vector<64x256xf32>
    %c0_16 = arith.constant 0 : index
    %c0_17 = arith.constant 0 : index
    %c0_18 = arith.constant 0 : index
    %17 = vector.load %arg8[%c0_16, %c0_17, %c0_18] : memref<1x1x256xf32, #tpu.memory_space<vmem>>, vector<1x1x256xf32>
    %18 = vector.shape_cast %17 : vector<1x1x256xf32> to vector<1x256xf32>
    %19 = vector.broadcast %18 : vector<1x256xf32> to vector<64x256xf32>
    %20 = arith.addf %16, %19 : vector<64x256xf32>
    %cst_19 = arith.constant 0.000000e+00 : f32
    %21 = vector.broadcast %cst_19 : f32 to vector<64x256xf32>
    %22 = arith.maximumf %20, %21 : vector<64x256xf32>
    %23 = arith.truncf %22 : vector<64x256xf32> to vector<64x256xbf16>
    %c0_20 = arith.constant 0 : index
    %c0_21 = arith.constant 0 : index
    %c0_22 = arith.constant 0 : index
    %24 = vector.load %arg9[%c0_20, %c0_21, %c0_22] : memref<1x256x256xbf16, #tpu.memory_space<vmem>>, vector<1x256x256xbf16>
    %25 = vector.shape_cast %24 : vector<1x256x256xbf16> to vector<256x256xbf16>
    %cst_23 = arith.constant dense<0.000000e+00> : vector<64x256xf32>
    %26 = tpu.matmul %23, %25, %cst_23 {dimension_numbers = #tpu.dot_dimension_numbers<[1], [0], [0], [1], [0, 0, 1, 1], [], []>} : vector<64x256xbf16>, vector<256x256xbf16>, vector<64x256xf32> -> vector<64x256xf32>
    %c0_24 = arith.constant 0 : index
    %c0_25 = arith.constant 0 : index
    %c0_26 = arith.constant 0 : index
    %27 = vector.load %arg10[%c0_24, %c0_25, %c0_26] : memref<1x1x256xf32, #tpu.memory_space<vmem>>, vector<1x1x256xf32>
    %28 = vector.shape_cast %27 : vector<1x1x256xf32> to vector<1x256xf32>
    %29 = vector.broadcast %28 : vector<1x256xf32> to vector<64x256xf32>
    %30 = arith.addf %26, %29 : vector<64x256xf32>
    %cst_27 = arith.constant 0.000000e+00 : f32
    %31 = vector.broadcast %cst_27 : f32 to vector<64x256xf32>
    %32 = arith.maximumf %30, %31 : vector<64x256xf32>
    %33 = arith.truncf %32 : vector<64x256xf32> to vector<64x256xbf16>
    %c0_28 = arith.constant 0 : index
    %c0_29 = arith.constant 0 : index
    %c0_30 = arith.constant 0 : index
    %34 = vector.load %arg11[%c0_28, %c0_29, %c0_30] : memref<1x256x128xbf16, #tpu.memory_space<vmem>>, vector<1x256x128xbf16>
    %35 = vector.shape_cast %34 : vector<1x256x128xbf16> to vector<256x128xbf16>
    %cst_31 = arith.constant dense<0.000000e+00> : vector<64x128xf32>
    %36 = tpu.matmul %33, %35, %cst_31 {dimension_numbers = #tpu.dot_dimension_numbers<[1], [0], [0], [1], [0, 0, 1, 1], [], []>} : vector<64x256xbf16>, vector<256x128xbf16>, vector<64x128xf32> -> vector<64x128xf32>
    %c0_32 = arith.constant 0 : index
    %c0_33 = arith.constant 0 : index
    %c0_34 = arith.constant 0 : index
    %37 = vector.load %arg12[%c0_32, %c0_33, %c0_34] : memref<1x1x128xf32, #tpu.memory_space<vmem>>, vector<1x1x128xf32>
    %38 = vector.shape_cast %37 : vector<1x1x128xf32> to vector<1x128xf32>
    %39 = vector.broadcast %38 : vector<1x128xf32> to vector<64x128xf32>
    %40 = arith.addf %36, %39 : vector<64x128xf32>
    %c0_35 = arith.constant 0 : index
    %c0_36 = arith.constant 0 : index
    %c0_37 = arith.constant 0 : index
    %41 = vector.load %arg13[%c0_35, %c0_36, %c0_37] : memref<1x64x128xf32, #tpu.memory_space<vmem>>, vector<1x64x128xf32>
    %42 = vector.shape_cast %41 : vector<1x64x128xf32> to vector<64x128xf32>
    %43 = vector.shape_cast %40 : vector<64x128xf32> to vector<1x64x128xf32>
    tpu.vector_store %arg13[%c0_35, %c0_36, %c0_37], %43 {strides = array<i32>} : memref<1x64x128xf32, #tpu.memory_space<vmem>>, vector<1x64x128xf32>,
    return
  }
  func.func @transform_0(%arg0: i32, %arg1: i32) -> (i32, i32) {
    %c0_i32 = arith.constant 0 : i32
    %c0_i32_0 = arith.constant 0 : i32
    return %arg1, %c0_i32 : i32, i32
  }
  func.func @transform_1(%arg0: i32, %arg1: i32) -> (i32, i32) {
    %c0_i32 = arith.constant 0 : i32
    %c0_i32_0 = arith.constant 0 : i32
    return %arg1, %c0_i32 : i32, i32
  }
  func.func @transform_2(%arg0: i32, %arg1: i32) -> (i32, i32) {
    %c0_i32 = arith.constant 0 : i32
    %c0_i32_0 = arith.constant 0 : i32
    return %arg1, %c0_i32 : i32, i32
  }
  func.func @transform_3(%arg0: i32, %arg1: i32) -> (i32, i32, i32) {
    %c0_i32 = arith.constant 0 : i32
    %c0_i32_0 = arith.constant 0 : i32
    %c0_i32_1 = arith.constant 0 : i32
    return %arg0, %c0_i32, %c0_i32_0 : i32, i32, i32
  }
  func.func @transform_4(%arg0: i32, %arg1: i32) -> (i32, i32, i32) {
    %c0_i32 = arith.constant 0 : i32
    %c0_i32_0 = arith.constant 0 : i32
    %c0_i32_1 = arith.constant 0 : i32
    return %arg0, %c0_i32, %c0_i32_0 : i32, i32, i32
  }
  func.func @transform_5(%arg0: i32, %arg1: i32) -> (i32, i32, i32) {
    %c0_i32 = arith.constant 0 : i32
    %c0_i32_0 = arith.constant 0 : i32
    %c0_i32_1 = arith.constant 0 : i32
    return %arg0, %c0_i32, %c0_i32_0 : i32, i32, i32
  }
  func.func @transform_6(%arg0: i32, %arg1: i32) -> (i32, i32, i32) {
    %c0_i32 = arith.constant 0 : i32
    %c0_i32_0 = arith.constant 0 : i32
    %c0_i32_1 = arith.constant 0 : i32
    return %arg0, %c0_i32, %c0_i32_0 : i32, i32, i32
  }
  func.func @transform_7(%arg0: i32, %arg1: i32) -> (i32, i32, i32) {
    %c0_i32 = arith.constant 0 : i32
    %c0_i32_0 = arith.constant 0 : i32
    %c0_i32_1 = arith.constant 0 : i32
    return %arg0, %c0_i32, %c0_i32_0 : i32, i32, i32
  }
  func.func @transform_8(%arg0: i32, %arg1: i32) -> (i32, i32, i32) {
    %c0_i32 = arith.constant 0 : i32
    %c0_i32_0 = arith.constant 0 : i32
    %c0_i32_1 = arith.constant 0 : i32
    return %arg0, %c0_i32, %c0_i32_0 : i32, i32, i32
  }
  func.func @transform_9(%arg0: i32, %arg1: i32) -> (i32, i32, i32) {
    %c0_i32 = arith.constant 0 : i32
    %c0_i32_0 = arith.constant 0 : i32
    %c0_i32_1 = arith.constant 0 : i32
    return %arg0, %c0_i32, %c0_i32_0 : i32, i32, i32
  }
  func.func @transform_10(%arg0: i32, %arg1: i32) -> (i32, i32, i32) {
    %c0_i32 = arith.constant 0 : i32
    %c0_i32_0 = arith.constant 0 : i32
    %c0_i32_1 = arith.constant 0 : i32
    return %arg0, %c0_i32, %c0_i32_0 : i32, i32, i32
  }
  func.func @transform_11(%arg0: i32, %arg1: i32) -> (i32, i32, i32) {
    %c0_i32 = arith.constant 0 : i32
    %c0_i32_0 = arith.constant 0 : i32
    return %arg0, %arg1, %c0_i32 : i32, i32, i32
  }
}

</mosaic_0001>

<llo_original>
// kernel: tpu_custom_call.1
$region0: #{tpu_custom_call.1}
  #allocation0 [shape = 'u32[]', space=smem, size = 0x4, offset = 0x4, fixed_abs, tag = 'smem constant byte address 0x4 - core index']
  #allocation1 [shape = 'u32[144,128]{1,0:T(1,128)}', space=vmem, size = 0x12000, scoped, tag = 'internal scratch']
  %s0 = inlined_call_operand.vmem [shape: f32[64,16], index: 0, kind: input, shape index: {}]
  %s1 = inlined_call_operand.vmem [shape: f32[64,8], index: 1, kind: input, shape index: {}]
  %s2 = inlined_call_operand.vmem [shape: f32[64,4], index: 2, kind: input, shape index: {}]
  %s3 = inlined_call_operand.vmem [shape: bf16[2,16,256], index: 3, kind: input, shape index: {}]
  %s4 = inlined_call_operand.vmem [shape: bf16[2,8,256], index: 4, kind: input, shape index: {}]
  %s5 = inlined_call_operand.vmem [shape: bf16[2,4,256], index: 5, kind: input, shape index: {}]
  %s6 = inlined_call_operand.vmem [shape: f32[2,1,256], index: 6, kind: input, shape index: {}]
  %s7 = inlined_call_operand.hbm [shape: bf16[2,256,256], index: 7, kind: input, shape index: {}]
  %s8 = inlined_call_operand.vmem [shape: f32[2,1,256], index: 8, kind: input, shape index: {}]
  %s9 = inlined_call_operand.hbm [shape: bf16[2,256,128], index: 9, kind: input, shape index: {}]
  %s10 = inlined_call_operand.vmem [shape: f32[2,1,128], index: 10, kind: input, shape index: {}]
  %s11 = inlined_call_operand.hbm [shape: f32[2,64,128], index: 11, kind: output, shape index: {}]
  %s12 = sld [smem:[#allocation0]]
  $region85: #{tpu_custom_call.1} parent=0
    _
  %s14 = ssub.s32 1, %s12
  %s15 = scalar_select 0, %s14, %s12
  $region1: #{tpu_custom_call.1} parent=0
    #allocation2 [shape = 'u8[262144]{0}', space=vmem, size = 0x40000, scoped, tag = 'input window, operand 7']
    #allocation3 [shape = 's32[2]{0}', space=sflag, size = 0x8, scoped, tag = 'scoped memory for tpu_custom_call.1']
    #allocation4 [shape = 's32[2]{0}', space=sflag, size = 0x8, scoped, tag = 'scoped memory for tpu_custom_call.1']
    #allocation5 [shape = 'u8[131072]{0}', space=vmem, size = 0x20000, scoped, tag = 'input window, operand 9']
    #allocation6 [shape = 's32[2]{0}', space=sflag, size = 0x8, scoped, tag = 'scoped memory for tpu_custom_call.1']
    #allocation7 [shape = 'u8[65536]{0}', space=vmem, size = 0x10000, scoped, tag = 'output window, operand 0']
    %16 = vsyncpa [#allocation3], 0
    %s17 = scalar_lea.sflag [#allocation3], 1
    %18 = vsyncpa %s17, 0
    %19 = vsyncpa [#allocation6], 0
    %s20 = scalar_lea.sflag [#allocation6], 1
    %21 = vsyncpa %s20, 0
    %22 = vsyncpa [#allocation4], 0
    %s23 = scalar_lea.sflag [#allocation4], 1
    %24 = vsyncpa %s23, 0
    loop: start=0, step=1, limit=4
    $region2: #{tpu_custom_call.1} parent=1 // loop_pre_header
      _
    $region3: #{tpu_custom_call.1} parent=1 // loop_header
      %s26 = sphi 0, %s30
      %p27 = scmp.ge.s32.totalorder %s26, 4
      %s33 = sphi 0, %s45
      %s34 = sphi 0, %s41
      %s35 = sphi 0, %s33
      %s36 = sphi 0, %s34
      %s37 = sphi 0, %s35
      %s38 = sphi 0, %s36
      %s48 = sphi 0, %s50
      %s51 = sphi 0, %s48
      %s52 = sphi 0, %s51
      %s68 = sphi 0, %s52
      %s74 = sphi 0, %s76
      %s77 = sphi 0, %s74
      %s78 = sphi 0, %s77
      %s94 = sphi 0, %s78
      %s100 = sphi 0, %s102
      %s103 = sphi 0, %s100
      %s104 = sphi 0, %s103
      %s120 = sphi 0, %s104
      %s126 = sphi 0, %s128
      %s129 = sphi 0, %s126
      %s130 = sphi 0, %s129
      %s146 = sphi 0, %s130
      %s152 = sphi 0, %s154
      %s155 = sphi 0, %s152
      %s156 = sphi 0, %s155
      %s172 = sphi 0, %s156
      %s178 = sphi 0, %s180
      %s181 = sphi 0, %s178
      %s182 = sphi 0, %s181
      %s198 = sphi 0, %s182
      %s204 = sphi 0, %s206
      %s207 = sphi 0, %s204
      %s208 = sphi 0, %s207
      %s224 = sphi 0, %s208
      %s230 = sphi 0, %s232
      %s233 = sphi 0, %s230
      %s234 = sphi 0, %s233
      %s250 = sphi 0, %s234
      %s256 = sphi 0, %s258
      %s259 = sphi 0, %s256
      %s260 = sphi 0, %s259
      %s276 = sphi 0, %s260
      %s282 = sphi 0, %s284
      %s285 = sphi 0, %s282
      %s286 = sphi 0, %s285
      %s302 = sphi 0, %s286
      %s308 = sphi 0, %s310
      %s311 = sphi 0, %s308
      %s312 = sphi 0, %s311
      %s328 = sphi 0, %s312
      %s336 = sphi 0, %s338
      %s339 = sphi 0, %s336
      %s340 = sphi 0, %s339
      %s356 = sphi 0, %s340
    $region4: #{tpu_custom_call.1} parent=1 // loop_header_branch
      %29 = sbr.rel (%p27) target = $region8
    $region5: #{tpu_custom_call.1} parent=1 // loop_body
      %s31 = ssub.s32 %s26, 1
      %s32 = ssub.s32 %s26, 2
      %s39 = sadd.s32 1, %s34
      %p40 = scmp.ge.s32.totalorder %s39, 1
      %s41 = scalar_select %p40, 0, %s39
      %s42 = sadd.s32 1, %s33
      %s43 = scalar_select %p40, %s42, %s33
      %p44 = scmp.ge.s32.totalorder %s43, 2
      %s45 = scalar_select %p44, 0, %s43
      %s46 = ssub.s32 %s34, %s41
      %p47 = scmp.eq.s32.totalorder %s46, 0
      %s49 = sadd.s32 %s48, 1
      %s50 = scalar_select %p47, %s48, %s49
      %p53 = pneg %p47
      %p54 = scmp.eq.s32.totalorder %s26, 1
      %p55 = por %p53, %p54
      %p56 = scmp.ne.s32.totalorder %s48, %s51
      %p57 = scmp.eq.s32.totalorder %s26, 0
      %p58 = por %p56, %p57
      %p59 = scmp.ne.s32.totalorder %s48, %s51
      %p60 = scmp.eq.s32.totalorder %s31, 1
      %p61 = por %p59, %p60
      %p62 = scmp.ne.s32.totalorder %s51, %s52
      %p63 = scmp.eq.s32.totalorder %s31, 0
      %p64 = por %p62, %p63
      %p65 = scmp.ne.s32.totalorder %s51, %s52
      %p66 = scmp.eq.s32.totalorder %s32, 1
      %p67 = por %p65, %p66
      %p69 = scmp.ne.s32.totalorder %s52, %s68
      %p70 = scmp.eq.s32.totalorder %s32, 0
      %p71 = por %p69, %p70
      %s72 = ssub.s32 %s34, %s41
      %p73 = scmp.eq.s32.totalorder %s72, 0
      %s75 = sadd.s32 %s74, 1
      %s76 = scalar_select %p73, %s74, %s75
      %p79 = pneg %p73
      %p80 = scmp.eq.s32.totalorder %s26, 1
      %p81 = por %p79, %p80
      %p82 = scmp.ne.s32.totalorder %s74, %s77
      %p83 = scmp.eq.s32.totalorder %s26, 0
      %p84 = por %p82, %p83
      %p85 = scmp.ne.s32.totalorder %s74, %s77
      %p86 = scmp.eq.s32.totalorder %s31, 1
      %p87 = por %p85, %p86
      %p88 = scmp.ne.s32.totalorder %s77, %s78
      %p89 = scmp.eq.s32.totalorder %s31, 0
      %p90 = por %p88, %p89
      %p91 = scmp.ne.s32.totalorder %s77, %s78
      %p92 = scmp.eq.s32.totalorder %s32, 1
      %p93 = por %p91, %p92
      %p95 = scmp.ne.s32.totalorder %s78, %s94
      %p96 = scmp.eq.s32.totalorder %s32, 0
      %p97 = por %p95, %p96
      %s98 = ssub.s32 %s34, %s41
      %p99 = scmp.eq.s32.totalorder %s98, 0
      %s101 = sadd.s32 %s100, 1
      %s102 = scalar_select %p99, %s100, %s101
      %p105 = pneg %p99
      %p106 = scmp.eq.s32.totalorder %s26, 1
      %p107 = por %p105, %p106
      %p108 = scmp.ne.s32.totalorder %s100, %s103
      %p109 = scmp.eq.s32.totalorder %s26, 0
      %p110 = por %p108, %p109
      %p111 = scmp.ne.s32.totalorder %s100, %s103
      %p112 = scmp.eq.s32.totalorder %s31, 1
      %p113 = por %p111, %p112
      %p114 = scmp.ne.s32.totalorder %s103, %s104
      %p115 = scmp.eq.s32.totalorder %s31, 0
      %p116 = por %p114, %p115
      %p117 = scmp.ne.s32.totalorder %s103, %s104
      %p118 = scmp.eq.s32.totalorder %s32, 1
      %p119 = por %p117, %p118
      %p121 = scmp.ne.s32.totalorder %s104, %s120
      %p122 = scmp.eq.s32.totalorder %s32, 0
      %p123 = por %p121, %p122
      %s124 = ssub.s32 %s33, %s45
      %p125 = scmp.eq.s32.totalorder %s124, 0
      %s127 = sadd.s32 %s126, 1
      %s128 = scalar_select %p125, %s126, %s127
      %p131 = pneg %p125
      %p132 = scmp.eq.s32.totalorder %s26, 1
      %p133 = por %p131, %p132
      %p134 = scmp.ne.s32.totalorder %s126, %s129
      %p135 = scmp.eq.s32.totalorder %s26, 0
      %p136 = por %p134, %p135
      %p137 = scmp.ne.s32.totalorder %s126, %s129
      %p138 = scmp.eq.s32.totalorder %s31, 1
      %p139 = por %p137, %p138
      %p140 = scmp.ne.s32.totalorder %s129, %s130
      %p141 = scmp.eq.s32.totalorder %s31, 0
      %p142 = por %p140, %p141
      %p143 = scmp.ne.s32.totalorder %s129, %s130
      %p144 = scmp.eq.s32.totalorder %s32, 1
      %p145 = por %p143, %p144
      %p147 = scmp.ne.s32.totalorder %s130, %s146
      %p148 = scmp.eq.s32.totalorder %s32, 0
      %p149 = por %p147, %p148
      %s150 = ssub.s32 %s33, %s45
      %p151 = scmp.eq.s32.totalorder %s150, 0
      %s153 = sadd.s32 %s152, 1
      %s154 = scalar_select %p151, %s152, %s153
      %p157 = pneg %p151
      %p158 = scmp.eq.s32.totalorder %s26, 1
      %p159 = por %p157, %p158
      %p160 = scmp.ne.s32.totalorder %s152, %s155
      %p161 = scmp.eq.s32.totalorder %s26, 0
      %p162 = por %p160, %p161
      %p163 = scmp.ne.s32.totalorder %s152, %s155
      %p164 = scmp.eq.s32.totalorder %s31, 1
      %p165 = por %p163, %p164
      %p166 = scmp.ne.s32.totalorder %s155, %s156
      %p167 = scmp.eq.s32.totalorder %s31, 0
      %p168 = por %p166, %p167
      %p169 = scmp.ne.s32.totalorder %s155, %s156
      %p170 = scmp.eq.s32.totalorder %s32, 1
      %p171 = por %p169, %p170
      %p173 = scmp.ne.s32.totalorder %s156, %s172
      %p174 = scmp.eq.s32.totalorder %s32, 0
      %p175 = por %p173, %p174
      %s176 = ssub.s32 %s33, %s45
      %p177 = scmp.eq.s32.totalorder %s176, 0
      %s179 = sadd.s32 %s178, 1
      %s180 = scalar_select %p177, %s178, %s179
      %p183 = pneg %p177
      %p184 = scmp.eq.s32.totalorder %s26, 1
      %p185 = por %p183, %p184
      %p186 = scmp.ne.s32.totalorder %s178, %s181
      %p187 = scmp.eq.s32.totalorder %s26, 0
      %p188 = por %p186, %p187
      %p189 = scmp.ne.s32.totalorder %s178, %s181
      %p190 = scmp.eq.s32.totalorder %s31, 1
      %p191 = por %p189, %p190
      %p192 = scmp.ne.s32.totalorder %s181, %s182
      %p193 = scmp.eq.s32.totalorder %s31, 0
      %p194 = por %p192, %p193
      %p195 = scmp.ne.s32.totalorder %s181, %s182
      %p196 = scmp.eq.s32.totalorder %s32, 1
      %p197 = por %p195, %p196
      %p199 = scmp.ne.s32.totalorder %s182, %s198
      %p200 = scmp.eq.s32.totalorder %s32, 0
      %p201 = por %p199, %p200
      %s202 = ssub.s32 %s33, %s45
      %p203 = scmp.eq.s32.totalorder %s202, 0
      %s205 = sadd.s32 %s204, 1
      %s206 = scalar_select %p203, %s204, %s205
      %p209 = pneg %p203
      %p210 = scmp.eq.s32.totalorder %s26, 1
      %p211 = por %p209, %p210
      %p212 = scmp.ne.s32.totalorder %s204, %s207
      %p213 = scmp.eq.s32.totalorder %s26, 0
      %p214 = por %p212, %p213
      %p215 = scmp.ne.s32.totalorder %s204, %s207
      %p216 = scmp.eq.s32.totalorder %s31, 1
      %p217 = por %p215, %p216
      %p218 = scmp.ne.s32.totalorder %s207, %s208
      %p219 = scmp.eq.s32.totalorder %s31, 0
      %p220 = por %p218, %p219
      %p221 = scmp.ne.s32.totalorder %s207, %s208
      %p222 = scmp.eq.s32.totalorder %s32, 1
      %p223 = por %p221, %p222
      %p225 = scmp.ne.s32.totalorder %s208, %s224
      %p226 = scmp.eq.s32.totalorder %s32, 0
      %p227 = por %p225, %p226
      %s228 = ssub.s32 %s33, %s45
      %p229 = scmp.eq.s32.totalorder %s228, 0
      %s231 = sadd.s32 %s230, 1
      %s232 = scalar_select %p229, %s230, %s231
      %p235 = pneg %p229
      %p236 = scmp.eq.s32.totalorder %s26, 1
      %p237 = por %p235, %p236
      %p238 = scmp.ne.s32.totalorder %s230, %s233
      %p239 = scmp.eq.s32.totalorder %s26, 0
      %p240 = por %p238, %p239
      %p241 = scmp.ne.s32.totalorder %s230, %s233
      %p242 = scmp.eq.s32.totalorder %s31, 1
      %p243 = por %p241, %p242
      %p244 = scmp.ne.s32.totalorder %s233, %s234
      %p245 = scmp.eq.s32.totalorder %s31, 0
      %p246 = por %p244, %p245
      %p247 = scmp.ne.s32.totalorder %s233, %s234
      %p248 = scmp.eq.s32.totalorder %s32, 1
      %p249 = por %p247, %p248
      %p251 = scmp.ne.s32.totalorder %s234, %s250
      %p252 = scmp.eq.s32.totalorder %s32, 0
      %p253 = por %p251, %p252
      %s254 = ssub.s32 %s33, %s45
      %p255 = scmp.eq.s32.totalorder %s254, 0
      %s257 = sadd.s32 %s256, 1
      %s258 = scalar_select %p255, %s256, %s257
      %p261 = pneg %p255
      %p262 = scmp.eq.s32.totalorder %s26, 1
      %p263 = por %p261, %p262
      %p264 = scmp.ne.s32.totalorder %s256, %s259
      %p265 = scmp.eq.s32.totalorder %s26, 0
      %p266 = por %p264, %p265
      %p267 = scmp.ne.s32.totalorder %s256, %s259
      %p268 = scmp.eq.s32.totalorder %s31, 1
      %p269 = por %p267, %p268
      %p270 = scmp.ne.s32.totalorder %s259, %s260
      %p271 = scmp.eq.s32.totalorder %s31, 0
      %p272 = por %p270, %p271
      %p273 = scmp.ne.s32.totalorder %s259, %s260
      %p274 = scmp.eq.s32.totalorder %s32, 1
      %p275 = por %p273, %p274
      %p277 = scmp.ne.s32.totalorder %s260, %s276
      %p278 = scmp.eq.s32.totalorder %s32, 0
      %p279 = por %p277, %p278
      %s280 = ssub.s32 %s33, %s45
      %p281 = scmp.eq.s32.totalorder %s280, 0
      %s283 = sadd.s32 %s282, 1
      %s284 = scalar_select %p281, %s282, %s283
      %p287 = pneg %p281
      %p288 = scmp.eq.s32.totalorder %s26, 1
      %p289 = por %p287, %p288
      %p290 = scmp.ne.s32.totalorder %s282, %s285
      %p291 = scmp.eq.s32.totalorder %s26, 0
      %p292 = por %p290, %p291
      %p293 = scmp.ne.s32.totalorder %s282, %s285
      %p294 = scmp.eq.s32.totalorder %s31, 1
      %p295 = por %p293, %p294
      %p296 = scmp.ne.s32.totalorder %s285, %s286
      %p297 = scmp.eq.s32.totalorder %s31, 0
      %p298 = por %p296, %p297
      %p299 = scmp.ne.s32.totalorder %s285, %s286
      %p300 = scmp.eq.s32.totalorder %s32, 1
      %p301 = por %p299, %p300
      %p303 = scmp.ne.s32.totalorder %s286, %s302
      %p304 = scmp.eq.s32.totalorder %s32, 0
      %p305 = por %p303, %p304
      %s306 = ssub.s32 %s33, %s45
      %p307 = scmp.eq.s32.totalorder %s306, 0
      %s309 = sadd.s32 %s308, 1
      %s310 = scalar_select %p307, %s308, %s309
      %p313 = pneg %p307
      %p314 = scmp.eq.s32.totalorder %s26, 1
      %p315 = por %p313, %p314
      %p316 = scmp.ne.s32.totalorder %s308, %s311
      %p317 = scmp.eq.s32.totalorder %s26, 0
      %p318 = por %p316, %p317
      %p319 = scmp.ne.s32.totalorder %s308, %s311
      %p320 = scmp.eq.s32.totalorder %s31, 1
      %p321 = por %p319, %p320
      %p322 = scmp.ne.s32.totalorder %s311, %s312
      %p323 = scmp.eq.s32.totalorder %s31, 0
      %p324 = por %p322, %p323
      %p325 = scmp.ne.s32.totalorder %s311, %s312
      %p326 = scmp.eq.s32.totalorder %s32, 1
      %p327 = por %p325, %p326
      %p329 = scmp.ne.s32.totalorder %s312, %s328
      %p330 = scmp.eq.s32.totalorder %s32, 0
      %p331 = por %p329, %p330
      %s332 = ssub.s32 %s33, %s45
      %s333 = ssub.s32 %s34, %s41
      %s334 = sor.u32 %s332, %s333
      %p335 = scmp.eq.s32.totalorder %s334, 0
      %s337 = sadd.s32 %s336, 1
      %s338 = scalar_select %p335, %s336, %s337
      %p341 = pneg %p335
      %p342 = scmp.eq.s32.totalorder %s26, 1
      %p343 = por %p341, %p342
      %p344 = scmp.ne.s32.totalorder %s336, %s339
      %p345 = scmp.eq.s32.totalorder %s26, 0
      %p346 = por %p344, %p345
      %p347 = scmp.ne.s32.totalorder %s336, %s339
      %p348 = scmp.eq.s32.totalorder %s31, 1
      %p349 = por %p347, %p348
      %p350 = scmp.ne.s32.totalorder %s339, %s340
      %p351 = scmp.eq.s32.totalorder %s31, 0
      %p352 = por %p350, %p351
      %p353 = scmp.ne.s32.totalorder %s339, %s340
      %p354 = scmp.eq.s32.totalorder %s32, 1
      %p355 = por %p353, %p354
      %p357 = scmp.ne.s32.totalorder %s340, %s356
      %p358 = scmp.eq.s32.totalorder %s32, 0
      %p359 = por %p357, %p358
      %p360 = scmp.le.s32.totalorder 1, %s26
      %p361 = scmp.lt.s32.totalorder %s26, 3
      %p362 = pnand %p360, %p361
      %p363 = pneg %p362
      // Predicated region
      $region9: #{tpu_custom_call.1} parent=5 // pred_check
        _
      $region10: #{tpu_custom_call.1} parent=5 // pred_check_branch
        %365 = sbr.rel (%p362) target = $region12
      $region11: #{tpu_custom_call.1} parent=5 // pred_region
        %s366 = ssub.s32 %s26, 1
        // Predicated region
        $region13: #{tpu_custom_call.1} parent=11 // pred_check
          %p367 = pneg %p64
        $region14: #{tpu_custom_call.1} parent=11 // pred_check_branch
          %369 = sbr.rel (%p367) target = $region16
        $region15: #{tpu_custom_call.1} parent=11 // pred_region
          %s370 = smul.u32 8, %s36
          %p371 = scmp.lt.s32.totalorder %s370, 7
          %s372 = scalar_select %p371, %s370, 7
          %s373 = smul.addr %s372, 8
          %s374 = scalar_lea.vmem %s0, %s373
          %s375 = smul.u32 8, %s36
        $region16: #{tpu_custom_call.1} parent=11 // pred_fallthru
          _
        // Predicated region
        $region17: #{tpu_custom_call.1} parent=11 // pred_check
          %p376 = pneg %p90
        $region18: #{tpu_custom_call.1} parent=11 // pred_check_branch
          %378 = sbr.rel (%p376) target = $region20
        $region19: #{tpu_custom_call.1} parent=11 // pred_region
          %s379 = smul.u32 8, %s36
          %p380 = scmp.lt.s32.totalorder %s379, 7
          %s381 = scalar_select %p380, %s379, 7
          %s382 = smul.addr %s381, 8
          %s383 = scalar_lea.vmem %s1, %s382
          %s384 = smul.u32 8, %s36
        $region20: #{tpu_custom_call.1} parent=11 // pred_fallthru
          _
        // Predicated region
        $region21: #{tpu_custom_call.1} parent=11 // pred_check
          %p385 = pneg %p116
        $region22: #{tpu_custom_call.1} parent=11 // pred_check_branch
          %387 = sbr.rel (%p385) target = $region24
        $region23: #{tpu_custom_call.1} parent=11 // pred_region
          %s388 = smul.u32 8, %s36
          %p389 = scmp.lt.s32.totalorder %s388, 7
          %s390 = scalar_select %p389, %s388, 7
          %s391 = smul.addr %s390, 8
          %s392 = scalar_lea.vmem %s2, %s391
          %s393 = smul.u32 8, %s36
        $region24: #{tpu_custom_call.1} parent=11 // pred_fallthru
          _
      $region12: #{tpu_custom_call.1} parent=5 // pred_fallthru
        _
      %p394 = scmp.lt.s32.totalorder %s26, 2
      // Predicated region
      $region25: #{tpu_custom_call.1} parent=5 // pred_check
        %p395 = pneg %p394
      $region26: #{tpu_custom_call.1} parent=5 // pred_check_branch
        %397 = sbr.rel (%p395) target = $region28
      $region27: #{tpu_custom_call.1} parent=5 // pred_region
        // Predicated region
        $region29: #{tpu_custom_call.1} parent=27 // pred_check
          %p398 = pneg %p136
        $region30: #{tpu_custom_call.1} parent=27 // pred_check_branch
          %400 = sbr.rel (%p398) target = $region32
        $region31: #{tpu_custom_call.1} parent=27 // pred_region
          %p401 = scmp.lt.s32.totalorder %s33, 1
          %s402 = scalar_select %p401, %s33, 1
          %s403 = smul.addr %s402, 4
          %s404 = smul.addr %s403, 4
          %s405 = scalar_lea.vmem %s3, %s404
        $region32: #{tpu_custom_call.1} parent=27 // pred_fallthru
          _
        // Predicated region
        $region33: #{tpu_custom_call.1} parent=27 // pred_check
          %p406 = pneg %p162
        $region34: #{tpu_custom_call.1} parent=27 // pred_check_branch
          %408 = sbr.rel (%p406) target = $region36
        $region35: #{tpu_custom_call.1} parent=27 // pred_region
          %p409 = scmp.lt.s32.totalorder %s33, 1
          %s410 = scalar_select %p409, %s33, 1
          %s411 = smul.addr %s410, 2
          %s412 = smul.addr %s411, 4
          %s413 = scalar_lea.vmem %s4, %s412
        $region36: #{tpu_custom_call.1} parent=27 // pred_fallthru
          _
        // Predicated region
        $region37: #{tpu_custom_call.1} parent=27 // pred_check
          %p414 = pneg %p188
        $region38: #{tpu_custom_call.1} parent=27 // pred_check_branch
          %416 = sbr.rel (%p414) target = $region40
        $region39: #{tpu_custom_call.1} parent=27 // pred_region
          %p417 = scmp.lt.s32.totalorder %s33, 1
          %s418 = scalar_select %p417, %s33, 1
          %s419 = smul.addr %s418, 2
          %s420 = smul.addr %s419, 2
          %s421 = scalar_lea.vmem %s5, %s420
        $region40: #{tpu_custom_call.1} parent=27 // pred_fallthru
          _
        // Predicated region
        $region41: #{tpu_custom_call.1} parent=27 // pred_check
          %p422 = pneg %p214
        $region42: #{tpu_custom_call.1} parent=27 // pred_check_branch
          %424 = sbr.rel (%p422) target = $region44
        $region43: #{tpu_custom_call.1} parent=27 // pred_region
          %p425 = scmp.lt.s32.totalorder %s33, 1
          %s426 = scalar_select %p425, %s33, 1
          %s427 = smul.addr %s426, 2
          %s428 = scalar_lea.vmem %s6, %s427
        $region44: #{tpu_custom_call.1} parent=27 // pred_fallthru
          _
        // Predicated region
        $region45: #{tpu_custom_call.1} parent=27 // pred_check
          %p429 = pneg %p240
        $region46: #{tpu_custom_call.1} parent=27 // pred_check_branch
          %431 = sbr.rel (%p429) target = $region48
        $region47: #{tpu_custom_call.1} parent=27 // pred_region
          %s432 = sand.u32 %s230, 1
          %s433 = scalar_lea.sflag [#allocation3], %s432
          %s434 = sand.u32 %s230, 1
          %s435 = smul.addr %s434, 256
          %s436 = scalar_lea.vmem [#allocation2], %s435
          %s438 = ssub.s32 4096, 4096
          %439 = vsyncadd %s433, %s438
          %s440 = smul.addr %s33, 64
          %s441 = smul.addr %s440, 64
          %s442 = scalar_lea.hbm %s7, %s441
          %s443 = sshll.u32 %s436, 4
          %s444 = int_to_ptr.vmem [resolvable:$true] %s443
          %449 = dma.hbm_to_vmem [thread:$0]  %s442, 4096, %s444, %s433, 128, 128, 8
        $region48: #{tpu_custom_call.1} parent=27 // pred_fallthru
          _
        // Predicated region
        $region49: #{tpu_custom_call.1} parent=27 // pred_check
          %p450 = pneg %p266
        $region50: #{tpu_custom_call.1} parent=27 // pred_check_branch
          %452 = sbr.rel (%p450) target = $region52
        $region51: #{tpu_custom_call.1} parent=27 // pred_region
          %p453 = scmp.lt.s32.totalorder %s33, 1
          %s454 = scalar_select %p453, %s33, 1
          %s455 = smul.addr %s454, 2
          %s456 = scalar_lea.vmem %s8, %s455
        $region52: #{tpu_custom_call.1} parent=27 // pred_fallthru
          _
        // Predicated region
        $region53: #{tpu_custom_call.1} parent=27 // pred_check
          %p457 = pneg %p292
        $region54: #{tpu_custom_call.1} parent=27 // pred_check_branch
          %459 = sbr.rel (%p457) target = $region56
        $region55: #{tpu_custom_call.1} parent=27 // pred_region
          %s460 = sand.u32 %s282, 1
          %s461 = scalar_lea.sflag [#allocation6], %s460
          %s462 = sand.u32 %s282, 1
          %s463 = smul.addr %s462, 128
          %s464 = scalar_lea.vmem [#allocation5], %s463
          %s466 = ssub.s32 2048, 2048
          %467 = vsyncadd %s461, %s466
          %s468 = smul.addr %s33, 32
          %s469 = smul.addr %s468, 64
          %s470 = scalar_lea.hbm %s9, %s469
          %s471 = sshll.u32 %s464, 4
          %s472 = int_to_ptr.vmem [resolvable:$true] %s471
          %477 = dma.hbm_to_vmem [thread:$0]  %s470, 2048, %s472, %s461, 64, 64, 4
        $region56: #{tpu_custom_call.1} parent=27 // pred_fallthru
          _
        // Predicated region
        $region57: #{tpu_custom_call.1} parent=27 // pred_check
          %p478 = pneg %p318
        $region58: #{tpu_custom_call.1} parent=27 // pred_check_branch
          %480 = sbr.rel (%p478) target = $region60
        $region59: #{tpu_custom_call.1} parent=27 // pred_region
          %p481 = scmp.lt.s32.totalorder %s33, 1
          %s482 = scalar_select %p481, %s33, 1
          %s483 = scalar_lea.vmem %s10, %s482
        $region60: #{tpu_custom_call.1} parent=27 // pred_fallthru
          _
      $region28: #{tpu_custom_call.1} parent=5 // pred_fallthru
        _
      %p484 = scmp.le.s32.totalorder 1, %s26
      %p485 = scmp.lt.s32.totalorder %s26, 3
      %p486 = pnand %p484, %p485
      %p487 = pneg %p486
      // Predicated region
      $region61: #{tpu_custom_call.1} parent=5 // pred_check
        _
      $region62: #{tpu_custom_call.1} parent=5 // pred_check_branch
        %489 = sbr.rel (%p486) target = $region64
      $region63: #{tpu_custom_call.1} parent=5 // pred_region
        %s490 = ssub.s32 %s26, 1
        %s491 = sand.u32 %s233, 1
        %s492 = scalar_lea.sflag [#allocation3], %s491
        %s493 = sand.u32 %s233, 1
        %s494 = smul.addr %s493, 256
        %s495 = scalar_lea.vmem [#allocation2], %s494
        // Predicated region
        $region65: #{tpu_custom_call.1} parent=63 // pred_check
          %p496 = pneg %p246
        $region66: #{tpu_custom_call.1} parent=63 // pred_check_branch
          %498 = sbr.rel (%p496) target = $region68
        $region67: #{tpu_custom_call.1} parent=63 // pred_region
          %499 = dma.done %s492, 4096
        $region68: #{tpu_custom_call.1} parent=63 // pred_fallthru
          _
        %s500 = sand.u32 %s285, 1
        %s501 = scalar_lea.sflag [#allocation6], %s500
        %s502 = sand.u32 %s285, 1
        %s503 = smul.addr %s502, 128
        %s504 = scalar_lea.vmem [#allocation5], %s503
        // Predicated region
        $region69: #{tpu_custom_call.1} parent=63 // pred_check
          %p505 = pneg %p298
        $region70: #{tpu_custom_call.1} parent=63 // pred_check_branch
          %507 = sbr.rel (%p505) target = $region72
        $region71: #{tpu_custom_call.1} parent=63 // pred_region
          %508 = dma.done %s501, 2048
        $region72: #{tpu_custom_call.1} parent=63 // pred_fallthru
          _
        %s509 = smul.u32 8, %s36
        %p510 = scmp.lt.s32.totalorder %s509, 7
        %s511 = scalar_select %p510, %s509, 7
        %s512 = smul.addr %s511, 8
        %s513 = scalar_lea.vmem %s0, %s512
        %p514 = pneg %p64
        %p515 = pneg %p61
        %s516 = smul.u32 8, %s36
        %p517 = scmp.lt.s32.totalorder %s516, 7
        %s518 = scalar_select %p517, %s516, 7
        %s519 = smul.addr %s518, 8
        %s520 = scalar_lea.vmem %s1, %s519
        %p521 = pneg %p90
        %p522 = pneg %p87
        %s523 = smul.u32 8, %s36
        %p524 = scmp.lt.s32.totalorder %s523, 7
        %s525 = scalar_select %p524, %s523, 7
        %s526 = smul.addr %s525, 8
        %s527 = scalar_lea.vmem %s2, %s526
        %p528 = pneg %p116
        %p529 = pneg %p113
        %p530 = scmp.lt.s32.totalorder %s35, 1
        %s531 = scalar_select %p530, %s35, 1
        %s532 = smul.addr %s531, 4
        %s533 = smul.addr %s532, 4
        %s534 = scalar_lea.vmem %s3, %s533
        %p535 = pneg %p142
        %p536 = pneg %p139
        %p537 = scmp.lt.s32.totalorder %s35, 1
        %s538 = scalar_select %p537, %s35, 1
        %s539 = smul.addr %s538, 2
        %s540 = smul.addr %s539, 4
        %s541 = scalar_lea.vmem %s4, %s540
        %p542 = pneg %p168
        %p543 = pneg %p165
        %p544 = scmp.lt.s32.totalorder %s35, 1
        %s545 = scalar_select %p544, %s35, 1
        %s546 = smul.addr %s545, 2
        %s547 = smul.addr %s546, 2
        %s548 = scalar_lea.vmem %s5, %s547
        %p549 = pneg %p194
        %p550 = pneg %p191
        %p551 = scmp.lt.s32.totalorder %s35, 1
        %s552 = scalar_select %p551, %s35, 1
        %s553 = smul.addr %s552, 2
        %s554 = scalar_lea.vmem %s6, %s553
        %p555 = pneg %p220
        %p556 = pneg %p217
        %s557 = sand.u32 %s233, 1
        %s558 = scalar_lea.sflag [#allocation3], %s557
        %s559 = sand.u32 %s233, 1
        %s560 = smul.addr %s559, 256
        %s561 = scalar_lea.vmem [#allocation2], %s560
        %p562 = pneg %p246
        %p563 = pneg %p243
        %p564 = scmp.lt.s32.totalorder %s35, 1
        %s565 = scalar_select %p564, %s35, 1
        %s566 = smul.addr %s565, 2
        %s567 = scalar_lea.vmem %s8, %s566
        %p568 = pneg %p272
        %p569 = pneg %p269
        %s570 = sand.u32 %s285, 1
        %s571 = scalar_lea.sflag [#allocation6], %s570
        %s572 = sand.u32 %s285, 1
        %s573 = smul.addr %s572, 128
        %s574 = scalar_lea.vmem [#allocation5], %s573
        %p575 = pneg %p298
        %p576 = pneg %p295
        %p577 = scmp.lt.s32.totalorder %s35, 1
        %s578 = scalar_select %p577, %s35, 1
        %s579 = scalar_lea.vmem %s10, %s578
        %p580 = pneg %p324
        %p581 = pneg %p321
        %p582 = pneg %p352
        %p583 = pneg %p349
        %s584 = sand.u32 %s339, 1
        %s585 = scalar_lea.sflag [#allocation4], %s584
        %s586 = sand.u32 %s339, 1
        %s587 = smul.addr %s586, 64
        %s588 = scalar_lea.vmem [#allocation7], %s587
        %s589 = smul.u32 8, %s36
        %p590 = scmp.lt.s32.totalorder %s589, 7
        %s591 = scalar_select %p590, %s589, 7
        %s592 = smul.addr %s591, 8
        %s593 = scalar_lea.vmem %s0, %s592
        %s594 = smul.u32 8, %s36
        %s595 = smul.u32 8, %s36
        %p596 = scmp.lt.s32.totalorder %s595, 7
        %s597 = scalar_select %p596, %s595, 7
        %s598 = smul.addr %s597, 8
        %s599 = scalar_lea.vmem %s1, %s598
        %s600 = smul.u32 8, %s36
        %s601 = smul.u32 8, %s36
        %p602 = scmp.lt.s32.totalorder %s601, 7
        %s603 = scalar_select %p602, %s601, 7
        %s604 = smul.addr %s603, 8
        %s605 = scalar_lea.vmem %s2, %s604
        %s606 = smul.u32 8, %s36
        %p607 = scmp.lt.s32.totalorder %s35, 1
        %s608 = scalar_select %p607, %s35, 1
        %s609 = smul.addr %s608, 4
        %s610 = smul.addr %s609, 4
        %s611 = scalar_lea.vmem %s3, %s610
        %p612 = scmp.lt.s32.totalorder %s35, 1
        %s613 = scalar_select %p612, %s35, 1
        %s614 = smul.addr %s613, 2
        %s615 = smul.addr %s614, 4
        %s616 = scalar_lea.vmem %s4, %s615
        %p617 = scmp.lt.s32.totalorder %s35, 1
        %s618 = scalar_select %p617, %s35, 1
        %s619 = smul.addr %s618, 2
        %s620 = smul.addr %s619, 2
        %s621 = scalar_lea.vmem %s5, %s620
        %p622 = scmp.lt.s32.totalorder %s35, 1
        %s623 = scalar_select %p622, %s35, 1
        %s624 = smul.addr %s623, 2
        %s625 = scalar_lea.vmem %s6, %s624
        %p626 = scmp.lt.s32.totalorder %s35, 1
        %s627 = scalar_select %p626, %s35, 1
        %s628 = smul.addr %s627, 2
        %s629 = scalar_lea.vmem %s8, %s628
        %p630 = scmp.lt.s32.totalorder %s35, 1
        %s631 = scalar_select %p630, %s35, 1
        %s632 = scalar_lea.vmem %s10, %s631
        %s633 = smul.u32 8, %s36
        %v635 = vld [vmem:[%s593] sm:$0xff]
        %v636 = vld [vmem:[%s593 + $0x8] sm:$0xff]
        %v637 = vld [vmem:[%s593 + $0x10] sm:$0xff]
        %v638 = vld [vmem:[%s593 + $0x18] sm:$0xff]
        %v639 = vld [vmem:[%s593 + $0x20] sm:$0xff]
        %v640 = vld [vmem:[%s593 + $0x28] sm:$0xff]
        %v641 = vld [vmem:[%s593 + $0x30] sm:$0xff]
        %v642 = vld [vmem:[%s593 + $0x38] sm:$0xff]
        %v643 = vpack.c.bf16 %v636, %v635
        %v644 = vpack.c.bf16 %v638, %v637
        %v645 = vpack.c.bf16 %v640, %v639
        %v646 = vpack.c.bf16 %v642, %v641
        %v647 = vld [vmem:[%s599] sm:$0xff]
        %v648 = vld [vmem:[%s599 + $0x8] sm:$0xff]
        %v649 = vld [vmem:[%s599 + $0x10] sm:$0xff]
        %v650 = vld [vmem:[%s599 + $0x18] sm:$0xff]
        %v651 = vld [vmem:[%s599 + $0x20] sm:$0xff]
        %v652 = vld [vmem:[%s599 + $0x28] sm:$0xff]
        %v653 = vld [vmem:[%s599 + $0x30] sm:$0xff]
        %v654 = vld [vmem:[%s599 + $0x38] sm:$0xff]
        %v655 = vpack.c.bf16 %v648, %v647
        %v656 = vpack.c.bf16 %v650, %v649
        %v657 = vpack.c.bf16 %v652, %v651
        %v658 = vpack.c.bf16 %v654, %v653
        %v659 = vld [vmem:[%s605] sm:$0xff]
        %v660 = vld [vmem:[%s605 + $0x8] sm:$0xff]
        %v661 = vld [vmem:[%s605 + $0x10] sm:$0xff]
        %v662 = vld [vmem:[%s605 + $0x18] sm:$0xff]
        %v663 = vld [vmem:[%s605 + $0x20] sm:$0xff]
        %v664 = vld [vmem:[%s605 + $0x28] sm:$0xff]
        %v665 = vld [vmem:[%s605 + $0x30] sm:$0xff]
        %v666 = vld [vmem:[%s605 + $0x38] sm:$0xff]
        %v667 = vpack.c.bf16 %v660, %v659
        %v668 = vpack.c.bf16 %v662, %v661
        %v669 = vpack.c.bf16 %v664, %v663
        %v670 = vpack.c.bf16 %v666, %v665
        %v671 = vld [vmem:[%s611] sm:$0xff]
        %v672 = vld [vmem:[%s611 + $0x8] sm:$0xff]
        %v673 = vld [vmem:[%s616] sm:$0xff]
        %v675 = vunpack.c.l.b16 %v673
        %v676 = vunpack.c.h.b16 %v673
        %v677 = vpack.c.b16 %v675, %v675
        %v678 = vpack.c.b16 %v676, %v676
        %vm679 = vcmask 64512
        %v681 = vsel %vm679, %v655, 0
        %v684 = vsel %vm679, %v656, 0
        %v687 = vsel %vm679, %v657, 0
        %v690 = vsel %vm679, %v658, 0
        %vm692 = vcmask 1043456
        %v694 = vsel %vm692, %v677, 0
        %v697 = vsel %vm692, %v678, 0
        %699 = vmatprep.subr.bf16.mxu0 %v697
        %700 = vmatpush1.bf16.msra.mxu0 %v694
        %701 = vmatprep.subr.bf16.mxu0 0
        %702 = vmatpush1.bf16.msra.mxu0 0
        %703 = vmatprep.subr.bf16.mxu0 0
        %704 = vmatpush1.bf16.msra.mxu0 0
        %705 = vmatprep.subr.bf16.mxu0 0
        %706 = vmatpush1.bf16.msra.mxu0 0
        %707 = vmatprep.subr.bf16.mxu0 0
        %708 = vmatpush1.bf16.msra.mxu0 0
        %709 = vmatprep.subr.bf16.mxu0 0
        %710 = vmatpush1.bf16.msra.mxu0 0
        %711 = vmatprep.subr.bf16.mxu0 0
        %712 = vmatpush1.bf16.msra.mxu0 0
        %713 = vmatprep.subr.bf16.mxu0 0
        %714 = vmatpush1.bf16.msra.mxu0 0
        %715 = vmatprep.subr.bf16.mxu0 0
        %716 = vmatpush1.bf16.msra.mxu0 0
        %717 = vmatprep.subr.bf16.mxu0 0
        %718 = vmatpush1.bf16.msra.mxu0 0
        %719 = vmatprep.subr.bf16.mxu0 0
        %720 = vmatpush1.bf16.msra.mxu0 0
        %721 = vmatprep.subr.bf16.mxu0 0
        %722 = vmatpush1.bf16.msra.mxu0 0
        %723 = vmatprep.subr.bf16.mxu0 0
        %724 = vmatpush1.bf16.msra.mxu0 0
        %725 = vmatprep.subr.bf16.mxu0 0
        %726 = vmatpush1.bf16.msra.mxu0 0
        %727 = vmatprep.subr.bf16.mxu0 0
        %728 = vmatpush1.bf16.msra.mxu0 0
        %729 = vmatprep.subr.bf16.mxu0 0
        %730 = vmatpush1.bf16.msra.mxu0 0
        %731 = vmatprep.mubr.bf16.mxu0 0
        %732 = vmatmul.mubr.bf16.gmra.mrb[0].mxu0 %v681
        %v733 = vpop.f32.mrb[0].mxu0
        %v734 = vadd.f32 0.0, %v733
        %v735 = vpop.f32.mrb[0].mxu0
        %v736 = vadd.f32 0.0, %v735
        %v737 = vpop.f32.mrb[0].mxu0
        %v738 = vadd.f32 0.0, %v737
        %v739 = vpop.f32.mrb[0].mxu0
        %v740 = vadd.f32 0.0, %v739
        %741 = vmatprep.mubr.bf16.mxu0 0
        %742 = vmatmul.mubr.bf16.gmra.mrb[0].mxu0 %v684
        %v743 = vpop.f32.mrb[0].mxu0
        %v744 = vadd.f32 0.0, %v743
        %v745 = vpop.f32.mrb[0].mxu0
        %v746 = vadd.f32 0.0, %v745
        %v747 = vpop.f32.mrb[0].mxu0
        %v748 = vadd.f32 0.0, %v747
        %v749 = vpop.f32.mrb[0].mxu0
        %v750 = vadd.f32 0.0, %v749
        %751 = vmatprep.mubr.bf16.mxu0 0
        %752 = vmatmul.mubr.bf16.gmra.mrb[0].mxu0 %v687
        %v753 = vpop.f32.mrb[0].mxu0
        %v754 = vadd.f32 0.0, %v753
        %v755 = vpop.f32.mrb[0].mxu0
        %v756 = vadd.f32 0.0, %v755
        %v757 = vpop.f32.mrb[0].mxu0
        %v758 = vadd.f32 0.0, %v757
        %v759 = vpop.f32.mrb[0].mxu0
        %v760 = vadd.f32 0.0, %v759
        %761 = vmatprep.mubr.bf16.mxu0 0
        %762 = vmatmul.mubr.bf16.gmra.mrb[0].mxu0 %v690
        %v763 = vpop.f32.mrb[0].mxu0
        %v764 = vadd.f32 0.0, %v763
        %v765 = vpop.f32.mrb[0].mxu0
        %v766 = vadd.f32 0.0, %v765
        %v767 = vpop.f32.mrb[0].mxu0
        %v768 = vadd.f32 0.0, %v767
        %v769 = vpop.f32.mrb[0].mxu0
        %v770 = vadd.f32 0.0, %v769
        %771 = vdwg.mxu0
        %v774 = vunpack.c.l.b16 %v671
        %v775 = vunpack.c.h.b16 %v671
        %v776 = vunpack.c.l.b16 %v672
        %v777 = vunpack.c.h.b16 %v672
        %v778 = vpack.c.b16 %v776, %v774
        %v779 = vpack.c.b16 %v777, %v775
        %vm782 = vcmask 130048
        %v784 = vsel %vm782, %v643, 0
        %v787 = vsel %vm782, %v644, 0
        %v790 = vsel %vm782, %v645, 0
        %v793 = vsel %vm782, %v646, 0
        %795 = vmatprep.subr.bf16.mxu0 %v779
        %796 = vmatpush1.bf16.msra.mxu0 %v778
        %797 = vmatprep.subr.bf16.mxu0 0
        %798 = vmatpush1.bf16.msra.mxu0 0
        %799 = vmatprep.subr.bf16.mxu0 0
        %800 = vmatpush1.bf16.msra.mxu0 0
        %801 = vmatprep.subr.bf16.mxu0 0
        %802 = vmatpush1.bf16.msra.mxu0 0
        %803 = vmatprep.subr.bf16.mxu0 0
        %804 = vmatpush1.bf16.msra.mxu0 0
        %805 = vmatprep.subr.bf16.mxu0 0
        %806 = vmatpush1.bf16.msra.mxu0 0
        %807 = vmatprep.subr.bf16.mxu0 0
        %808 = vmatpush1.bf16.msra.mxu0 0
        %809 = vmatprep.subr.bf16.mxu0 0
        %810 = vmatpush1.bf16.msra.mxu0 0
        %811 = vmatprep.subr.bf16.mxu0 0
        %812 = vmatpush1.bf16.msra.mxu0 0
        %813 = vmatprep.subr.bf16.mxu0 0
        %814 = vmatpush1.bf16.msra.mxu0 0
        %815 = vmatprep.subr.bf16.mxu0 0
        %816 = vmatpush1.bf16.msra.mxu0 0
        %817 = vmatprep.subr.bf16.mxu0 0
        %818 = vmatpush1.bf16.msra.mxu0 0
        %819 = vmatprep.subr.bf16.mxu0 0
        %820 = vmatpush1.bf16.msra.mxu0 0
        %821 = vmatprep.subr.bf16.mxu0 0
        %822 = vmatpush1.bf16.msra.mxu0 0
        %823 = vmatprep.subr.bf16.mxu0 0
        %824 = vmatpush1.bf16.msra.mxu0 0
        %825 = vmatprep.subr.bf16.mxu0 0
        %826 = vmatpush1.bf16.msra.mxu0 0
        %827 = vmatprep.mubr.bf16.mxu0 0
        %828 = vmatmul.mubr.bf16.gmra.mrb[0].mxu0 %v784
        %v829 = vpop.f32.mrb[0].mxu0
        %v830 = vadd.f32 %v734, %v829
        %v831 = vpop.f32.mrb[0].mxu0
        %v832 = vadd.f32 %v736, %v831
        %v833 = vpop.f32.mrb[0].mxu0
        %v834 = vadd.f32 %v738, %v833
        %v835 = vpop.f32.mrb[0].mxu0
        %v836 = vadd.f32 %v740, %v835
        %837 = vmatprep.mubr.bf16.mxu0 0
        %838 = vmatmul.mubr.bf16.gmra.mrb[0].mxu0 %v787
        %v839 = vpop.f32.mrb[0].mxu0
        %v840 = vadd.f32 %v744, %v839
        %v841 = vpop.f32.mrb[0].mxu0
        %v842 = vadd.f32 %v746, %v841
        %v843 = vpop.f32.mrb[0].mxu0
        %v844 = vadd.f32 %v748, %v843
        %v845 = vpop.f32.mrb[0].mxu0
        %v846 = vadd.f32 %v750, %v845
        %847 = vmatprep.mubr.bf16.mxu0 0
        %848 = vmatmul.mubr.bf16.gmra.mrb[0].mxu0 %v790
        %v849 = vpop.f32.mrb[0].mxu0
        %v850 = vadd.f32 %v754, %v849
        %v851 = vpop.f32.mrb[0].mxu0
        %v852 = vadd.f32 %v756, %v851
        %v853 = vpop.f32.mrb[0].mxu0
        %v854 = vadd.f32 %v758, %v853
        %v855 = vpop.f32.mrb[0].mxu0
        %v856 = vadd.f32 %v760, %v855
        %857 = vmatprep.mubr.bf16.mxu0 0
        %858 = vmatmul.mubr.bf16.gmra.mrb[0].mxu0 %v793
        %v859 = vpop.f32.mrb[0].mxu0
        %v860 = vadd.f32 %v764, %v859
        %v861 = vpop.f32.mrb[0].mxu0
        %v862 = vadd.f32 %v766, %v861
        %v863 = vpop.f32.mrb[0].mxu0
        %v864 = vadd.f32 %v768, %v863
        %v865 = vpop.f32.mrb[0].mxu0
        %v866 = vadd.f32 %v770, %v865
        %867 = vdwg.mxu0
        %v868 = vld [vmem:[%s621] sm:$0xf]
        %v871 = vunpack.c.l.s4 1983009808
        %v872 = vunpack.c.0.s8 %v871
        %v873 = vlaneseq
        %v874 = vshrl.u32 %v873, 7
        %v875 = vsub.s32 %v872, %v874
        %v876 = vrot.slane %v868, %v875
        %v877 = vcombine.high %v876, %v876
        %vm878 = vcmask 31744
        %v880 = vsel %vm878, %v667, 0
        %v883 = vsel %vm878, %v668, 0
        %v886 = vsel %vm878, %v669, 0
        %v889 = vsel %vm878, %v670, 0
        %vm891 = vcmask 1041408
        %v893 = vsel %vm891, %v876, 0
        %v896 = vsel %vm891, %v877, 0
        %898 = vmatprep.subr.bf16.mxu0 %v896
        %899 = vmatpush1.bf16.msra.mxu0 %v893
        %900 = vmatprep.subr.bf16.mxu0 0
        %901 = vmatpush1.bf16.msra.mxu0 0
        %902 = vmatprep.subr.bf16.mxu0 0
        %903 = vmatpush1.bf16.msra.mxu0 0
        %904 = vmatprep.subr.bf16.mxu0 0
        %905 = vmatpush1.bf16.msra.mxu0 0
        %906 = vmatprep.subr.bf16.mxu0 0
        %907 = vmatpush1.bf16.msra.mxu0 0
        %908 = vmatprep.subr.bf16.mxu0 0
        %909 = vmatpush1.bf16.msra.mxu0 0
        %910 = vmatprep.subr.bf16.mxu0 0
        %911 = vmatpush1.bf16.msra.mxu0 0
        %912 = vmatprep.subr.bf16.mxu0 0
        %913 = vmatpush1.bf16.msra.mxu0 0
        %914 = vmatprep.subr.bf16.mxu0 0
        %915 = vmatpush1.bf16.msra.mxu0 0
        %916 = vmatprep.subr.bf16.mxu0 0
        %917 = vmatpush1.bf16.msra.mxu0 0
        %918 = vmatprep.subr.bf16.mxu0 0
        %919 = vmatpush1.bf16.msra.mxu0 0
        %920 = vmatprep.subr.bf16.mxu0 0
        %921 = vmatpush1.bf16.msra.mxu0 0
        %922 = vmatprep.subr.bf16.mxu0 0
        %923 = vmatpush1.bf16.msra.mxu0 0
        %924 = vmatprep.subr.bf16.mxu0 0
        %925 = vmatpush1.bf16.msra.mxu0 0
        %926 = vmatprep.subr.bf16.mxu0 0
        %927 = vmatpush1.bf16.msra.mxu0 0
        %928 = vmatprep.subr.bf16.mxu0 0
        %929 = vmatpush1.bf16.msra.mxu0 0
        %930 = vmatprep.mubr.bf16.mxu0 0
        %931 = vmatmul.mubr.bf16.gmra.mrb[0].mxu0 %v880
        %v932 = vpop.f32.mrb[0].mxu0
        %v933 = vadd.f32 0.0, %v932
        %v934 = vpop.f32.mrb[0].mxu0
        %v935 = vadd.f32 0.0, %v934
        %v936 = vpop.f32.mrb[0].mxu0
        %v937 = vadd.f32 0.0, %v936
        %v938 = vpop.f32.mrb[0].mxu0
        %v939 = vadd.f32 0.0, %v938
        %940 = vmatprep.mubr.bf16.mxu0 0
        %941 = vmatmul.mubr.bf16.gmra.mrb[0].mxu0 %v883
        %v942 = vpop.f32.mrb[0].mxu0
        %v943 = vadd.f32 0.0, %v942
        %v944 = vpop.f32.mrb[0].mxu0
        %v945 = vadd.f32 0.0, %v944
        %v946 = vpop.f32.mrb[0].mxu0
        %v947 = vadd.f32 0.0, %v946
        %v948 = vpop.f32.mrb[0].mxu0
        %v949 = vadd.f32 0.0, %v948
        %950 = vmatprep.mubr.bf16.mxu0 0
        %951 = vmatmul.mubr.bf16.gmra.mrb[0].mxu0 %v886
        %v952 = vpop.f32.mrb[0].mxu0
        %v953 = vadd.f32 0.0, %v952
        %v954 = vpop.f32.mrb[0].mxu0
        %v955 = vadd.f32 0.0, %v954
        %v956 = vpop.f32.mrb[0].mxu0
        %v957 = vadd.f32 0.0, %v956
        %v958 = vpop.f32.mrb[0].mxu0
        %v959 = vadd.f32 0.0, %v958
        %960 = vmatprep.mubr.bf16.mxu0 0
        %961 = vmatmul.mubr.bf16.gmra.mrb[0].mxu0 %v889
        %v962 = vpop.f32.mrb[0].mxu0
        %v963 = vadd.f32 0.0, %v962
        %v964 = vpop.f32.mrb[0].mxu0
        %v965 = vadd.f32 0.0, %v964
        %v966 = vpop.f32.mrb[0].mxu0
        %v967 = vadd.f32 0.0, %v966
        %v968 = vpop.f32.mrb[0].mxu0
        %v969 = vadd.f32 0.0, %v968
        %970 = vdwg.mxu0
        %v971 = vadd.f32 %v830, %v933
        %v972 = vadd.f32 %v832, %v935
        %v973 = vadd.f32 %v834, %v937
        %v974 = vadd.f32 %v836, %v939
        %v975 = vadd.f32 %v840, %v943
        %v976 = vadd.f32 %v842, %v945
        %v977 = vadd.f32 %v844, %v947
        %v978 = vadd.f32 %v846, %v949
        %v979 = vadd.f32 %v850, %v953
        %v980 = vadd.f32 %v852, %v955
        %v981 = vadd.f32 %v854, %v957
        %v982 = vadd.f32 %v856, %v959
        %v983 = vadd.f32 %v860, %v963
        %v984 = vadd.f32 %v862, %v965
        %v985 = vadd.f32 %v864, %v967
        %v986 = vadd.f32 %v866, %v969
        %v987 = vld [vmem:[%s625] sm:$0x3]
        %v989 = vlaneseq
        %v990 = vshrl.u32 %v989, 7
        %v991 = vsub.s32 0, %v990
        %v992 = vrot.slane %v987, %v991
        %v993 = vlaneseq
        %v994 = vshrl.u32 %v993, 7
        %v995 = vsub.s32 1, %v994
        %v996 = vrot.slane %v987, %v995
        %v999 = vadd.f32 %v971, %v992
        %v1000 = vadd.f32 %v972, %v996
        %v1001 = vadd.f32 %v973, %v992
        %v1002 = vadd.f32 %v974, %v996
        %v1003 = vadd.f32 %v975, %v992
        %v1004 = vadd.f32 %v976, %v996
        %v1005 = vadd.f32 %v977, %v992
        %v1006 = vadd.f32 %v978, %v996
        %v1007 = vadd.f32 %v979, %v992
        %v1008 = vadd.f32 %v980, %v996
        %v1009 = vadd.f32 %v981, %v992
        %v1010 = vadd.f32 %v982, %v996
        %v1011 = vadd.f32 %v983, %v992
        %v1012 = vadd.f32 %v984, %v996
        %v1013 = vadd.f32 %v985, %v992
        %v1014 = vadd.f32 %v986, %v996
        %v1015 = vmax.f32 %v999, 0.0
        %v1016 = vmax.f32 %v1000, 0.0
        %v1017 = vmax.f32 %v1001, 0.0
        %v1018 = vmax.f32 %v1002, 0.0
        %v1019 = vmax.f32 %v1003, 0.0
        %v1020 = vmax.f32 %v1004, 0.0
        %v1021 = vmax.f32 %v1005, 0.0
        %v1022 = vmax.f32 %v1006, 0.0
        %v1023 = vmax.f32 %v1007, 0.0
        %v1024 = vmax.f32 %v1008, 0.0
        %v1025 = vmax.f32 %v1009, 0.0
        %v1026 = vmax.f32 %v1010, 0.0
        %v1027 = vmax.f32 %v1011, 0.0
        %v1028 = vmax.f32 %v1012, 0.0
        %v1029 = vmax.f32 %v1013, 0.0
        %v1030 = vmax.f32 %v1014, 0.0
        %v1031 = vpack.c.bf16 %v1017, %v1015
        %v1032 = vpack.c.bf16 %v1018, %v1016
        %v1033 = vpack.c.bf16 %v1021, %v1019
        %v1034 = vpack.c.bf16 %v1022, %v1020
        %v1035 = vpack.c.bf16 %v1025, %v1023
        %v1036 = vpack.c.bf16 %v1026, %v1024
        %v1037 = vpack.c.bf16 %v1029, %v1027
        %v1038 = vpack.c.bf16 %v1030, %v1028
        %v1039 = vld [vmem:[%s495] sm:$0xff]
        %v1040 = vld [vmem:[%s495 + $0x8] sm:$0xff]
        %v1041 = vld [vmem:[%s495 + $0x10] sm:$0xff]
        %v1042 = vld [vmem:[%s495 + $0x18] sm:$0xff]
        %v1043 = vld [vmem:[%s495 + $0x20] sm:$0xff]
        %v1044 = vld [vmem:[%s495 + $0x28] sm:$0xff]
        %v1045 = vld [vmem:[%s495 + $0x30] sm:$0xff]
        %v1046 = vld [vmem:[%s495 + $0x38] sm:$0xff]
        %v1047 = vld [vmem:[%s495 + $0x40] sm:$0xff]
        %v1048 = vld [vmem:[%s495 + $0x48] sm:$0xff]
        %v1049 = vld [vmem:[%s495 + $0x50] sm:$0xff]
        %v1050 = vld [vmem:[%s495 + $0x58] sm:$0xff]
        %v1051 = vld [vmem:[%s495 + $0x60] sm:$0xff]
        %v1052 = vld [vmem:[%s495 + $0x68] sm:$0xff]
        %v1053 = vld [vmem:[%s495 + $0x70] sm:$0xff]
        %v1054 = vld [vmem:[%s495 + $0x78] sm:$0xff]
        %v1055 = vld [vmem:[%s495 + $0x80] sm:$0xff]
        %v1056 = vld [vmem:[%s495 + $0x88] sm:$0xff]
        %v1057 = vld [vmem:[%s495 + $0x90] sm:$0xff]
        %v1058 = vld [vmem:[%s495 + $0x98] sm:$0xff]
        %v1059 = vld [vmem:[%s495 + $0xa0] sm:$0xff]
        %v1060 = vld [vmem:[%s495 + $0xa8] sm:$0xff]
        %v1061 = vld [vmem:[%s495 + $0xb0] sm:$0xff]
        %v1062 = vld [vmem:[%s495 + $0xb8] sm:$0xff]
        %v1063 = vld [vmem:[%s495 + $0xc0] sm:$0xff]
        %v1064 = vld [vmem:[%s495 + $0xc8] sm:$0xff]
        %v1065 = vld [vmem:[%s495 + $0xd0] sm:$0xff]
        %v1066 = vld [vmem:[%s495 + $0xd8] sm:$0xff]
        %v1067 = vld [vmem:[%s495 + $0xe0] sm:$0xff]
        %v1068 = vld [vmem:[%s495 + $0xe8] sm:$0xff]
        %v1069 = vld [vmem:[%s495 + $0xf0] sm:$0xff]
        %v1070 = vld [vmem:[%s495 + $0xf8] sm:$0xff]
        %v1071 = vld [vmem:[%s629] sm:$0x3]
        %v1073 = vlaneseq
        %v1074 = vshrl.u32 %v1073, 7
        %v1075 = vsub.s32 0, %v1074
        %v1076 = vrot.slane %v1071, %v1075
        %v1077 = vlaneseq
        %v1078 = vshrl.u32 %v1077, 7
        %v1079 = vsub.s32 1, %v1078
        %v1080 = vrot.slane %v1071, %v1079
        %v1115 = vunpack.c.l.b16 %v1039
        %v1116 = vunpack.c.h.b16 %v1039
        %v1117 = vunpack.c.l.b16 %v1040
        %v1118 = vunpack.c.h.b16 %v1040
        %v1119 = vunpack.c.l.b16 %v1041
        %v1120 = vunpack.c.h.b16 %v1041
        %v1121 = vunpack.c.l.b16 %v1042
        %v1122 = vunpack.c.h.b16 %v1042
        %v1123 = vunpack.c.l.b16 %v1043
        %v1124 = vunpack.c.h.b16 %v1043
        %v1125 = vunpack.c.l.b16 %v1044
        %v1126 = vunpack.c.h.b16 %v1044
        %v1127 = vunpack.c.l.b16 %v1045
        %v1128 = vunpack.c.h.b16 %v1045
        %v1129 = vunpack.c.l.b16 %v1046
        %v1130 = vunpack.c.h.b16 %v1046
        %v1131 = vunpack.c.l.b16 %v1047
        %v1132 = vunpack.c.h.b16 %v1047
        %v1133 = vunpack.c.l.b16 %v1048
        %v1134 = vunpack.c.h.b16 %v1048
        %v1135 = vunpack.c.l.b16 %v1049
        %v1136 = vunpack.c.h.b16 %v1049
        %v1137 = vunpack.c.l.b16 %v1050
        %v1138 = vunpack.c.h.b16 %v1050
        %v1139 = vunpack.c.l.b16 %v1051
        %v1140 = vunpack.c.h.b16 %v1051
        %v1141 = vunpack.c.l.b16 %v1052
        %v1142 = vunpack.c.h.b16 %v1052
        %v1143 = vunpack.c.l.b16 %v1053
        %v1144 = vunpack.c.h.b16 %v1053
        %v1145 = vunpack.c.l.b16 %v1054
        %v1146 = vunpack.c.h.b16 %v1054
        %v1147 = vunpack.c.l.b16 %v1055
        %v1148 = vunpack.c.h.b16 %v1055
        %v1149 = vunpack.c.l.b16 %v1056
        %v1150 = vunpack.c.h.b16 %v1056
        %v1151 = vunpack.c.l.b16 %v1057
        %v1152 = vunpack.c.h.b16 %v1057
        %v1153 = vunpack.c.l.b16 %v1058
        %v1154 = vunpack.c.h.b16 %v1058
        %v1155 = vunpack.c.l.b16 %v1059
        %v1156 = vunpack.c.h.b16 %v1059
        %v1157 = vunpack.c.l.b16 %v1060
        %v1158 = vunpack.c.h.b16 %v1060
        %v1159 = vunpack.c.l.b16 %v1061
        %v1160 = vunpack.c.h.b16 %v1061
        %v1161 = vunpack.c.l.b16 %v1062
        %v1162 = vunpack.c.h.b16 %v1062
        %v1163 = vunpack.c.l.b16 %v1063
        %v1164 = vunpack.c.h.b16 %v1063
        %v1165 = vunpack.c.l.b16 %v1064
        %v1166 = vunpack.c.h.b16 %v1064
        %v1167 = vunpack.c.l.b16 %v1065
        %v1168 = vunpack.c.h.b16 %v1065
        %v1169 = vunpack.c.l.b16 %v1066
        %v1170 = vunpack.c.h.b16 %v1066
        %v1171 = vunpack.c.l.b16 %v1067
        %v1172 = vunpack.c.h.b16 %v1067
        %v1173 = vunpack.c.l.b16 %v1068
        %v1174 = vunpack.c.h.b16 %v1068
        %v1175 = vunpack.c.l.b16 %v1069
        %v1176 = vunpack.c.h.b16 %v1069
        %v1177 = vunpack.c.l.b16 %v1070
        %v1178 = vunpack.c.h.b16 %v1070
        %v1179 = vpack.c.b16 %v1117, %v1115
        %v1180 = vpack.c.b16 %v1118, %v1116
        %v1181 = vpack.c.b16 %v1121, %v1119
        %v1182 = vpack.c.b16 %v1122, %v1120
        %v1183 = vpack.c.b16 %v1125, %v1123
        %v1184 = vpack.c.b16 %v1126, %v1124
        %v1185 = vpack.c.b16 %v1129, %v1127
        %v1186 = vpack.c.b16 %v1130, %v1128
        %v1187 = vpack.c.b16 %v1133, %v1131
        %v1188 = vpack.c.b16 %v1134, %v1132
        %v1189 = vpack.c.b16 %v1137, %v1135
        %v1190 = vpack.c.b16 %v1138, %v1136
        %v1191 = vpack.c.b16 %v1141, %v1139
        %v1192 = vpack.c.b16 %v1142, %v1140
        %v1193 = vpack.c.b16 %v1145, %v1143
        %v1194 = vpack.c.b16 %v1146, %v1144
        %v1195 = vpack.c.b16 %v1149, %v1147
        %v1196 = vpack.c.b16 %v1150, %v1148
        %v1197 = vpack.c.b16 %v1153, %v1151
        %v1198 = vpack.c.b16 %v1154, %v1152
        %v1199 = vpack.c.b16 %v1157, %v1155
        %v1200 = vpack.c.b16 %v1158, %v1156
        %v1201 = vpack.c.b16 %v1161, %v1159
        %v1202 = vpack.c.b16 %v1162, %v1160
        %v1203 = vpack.c.b16 %v1165, %v1163
        %v1204 = vpack.c.b16 %v1166, %v1164
        %v1205 = vpack.c.b16 %v1169, %v1167
        %v1206 = vpack.c.b16 %v1170, %v1168
        %v1207 = vpack.c.b16 %v1173, %v1171
        %v1208 = vpack.c.b16 %v1174, %v1172
        %v1209 = vpack.c.b16 %v1177, %v1175
        %v1210 = vpack.c.b16 %v1178, %v1176
        %1243 = vmatprep.subr.bf16.mxu0 %v1180
        %1244 = vmatpush1.bf16.msra.mxu0 %v1179
        %1245 = vmatprep.subr.bf16.mxu0 %v1182
        %1246 = vmatpush1.bf16.msra.mxu0 %v1181
        %1247 = vmatprep.subr.bf16.mxu0 %v1184
        %1248 = vmatpush1.bf16.msra.mxu0 %v1183
        %1249 = vmatprep.subr.bf16.mxu0 %v1186
        %1250 = vmatpush1.bf16.msra.mxu0 %v1185
        %1251 = vmatprep.subr.bf16.mxu0 %v1188
        %1252 = vmatpush1.bf16.msra.mxu0 %v1187
        %1253 = vmatprep.subr.bf16.mxu0 %v1190
        %1254 = vmatpush1.bf16.msra.mxu0 %v1189
        %1255 = vmatprep.subr.bf16.mxu0 %v1192
        %1256 = vmatpush1.bf16.msra.mxu0 %v1191
        %1257 = vmatprep.subr.bf16.mxu0 %v1194
        %1258 = vmatpush1.bf16.msra.mxu0 %v1193
        %1259 = vmatprep.subr.bf16.mxu0 %v1196
        %1260 = vmatpush1.bf16.msra.mxu0 %v1195
        %1261 = vmatprep.subr.bf16.mxu0 %v1198
        %1262 = vmatpush1.bf16.msra.mxu0 %v1197
        %1263 = vmatprep.subr.bf16.mxu0 %v1200
        %1264 = vmatpush1.bf16.msra.mxu0 %v1199
        %1265 = vmatprep.subr.bf16.mxu0 %v1202
        %1266 = vmatpush1.bf16.msra.mxu0 %v1201
        %1267 = vmatprep.subr.bf16.mxu0 %v1204
        %1268 = vmatpush1.bf16.msra.mxu0 %v1203
        %1269 = vmatprep.subr.bf16.mxu0 %v1206
        %1270 = vmatpush1.bf16.msra.mxu0 %v1205
        %1271 = vmatprep.subr.bf16.mxu0 %v1208
        %1272 = vmatpush1.bf16.msra.mxu0 %v1207
        %1273 = vmatprep.subr.bf16.mxu0 %v1210
        %1274 = vmatpush1.bf16.msra.mxu0 %v1209
        %1275 = vmatprep.mubr.bf16.mxu0 %v1032
        %1276 = vmatmul.mubr.bf16.gmra.mrb[0].mxu0 %v1031
        %v1277 = vpop.f32.mrb[0].mxu0
        %v1278 = vadd.f32 %v1076, %v1277
        %v1279 = vpop.f32.mrb[0].mxu0
        %v1280 = vadd.f32 %v1080, %v1279
        %v1281 = vpop.f32.mrb[0].mxu0
        %v1282 = vadd.f32 %v1076, %v1281
        %v1283 = vpop.f32.mrb[0].mxu0
        %v1284 = vadd.f32 %v1080, %v1283
        %1285 = vmatprep.mubr.bf16.mxu0 %v1034
        %1286 = vmatmul.mubr.bf16.gmra.mrb[0].mxu0 %v1033
        %v1287 = vpop.f32.mrb[0].mxu0
        %v1288 = vadd.f32 %v1076, %v1287
        %v1289 = vpop.f32.mrb[0].mxu0
        %v1290 = vadd.f32 %v1080, %v1289
        %v1291 = vpop.f32.mrb[0].mxu0
        %v1292 = vadd.f32 %v1076, %v1291
        %v1293 = vpop.f32.mrb[0].mxu0
        %v1294 = vadd.f32 %v1080, %v1293
        %1295 = vmatprep.mubr.bf16.mxu0 %v1036
        %1296 = vmatmul.mubr.bf16.gmra.mrb[0].mxu0 %v1035
        %v1297 = vpop.f32.mrb[0].mxu0
        %v1298 = vadd.f32 %v1076, %v1297
        %v1299 = vpop.f32.mrb[0].mxu0
        %v1300 = vadd.f32 %v1080, %v1299
        %v1301 = vpop.f32.mrb[0].mxu0
        %v1302 = vadd.f32 %v1076, %v1301
        %v1303 = vpop.f32.mrb[0].mxu0
        %v1304 = vadd.f32 %v1080, %v1303
        %1305 = vmatprep.mubr.bf16.mxu0 %v1038
        %1306 = vmatmul.mubr.bf16.gmra.mrb[0].mxu0 %v1037
        %v1307 = vpop.f32.mrb[0].mxu0
        %v1308 = vadd.f32 %v1076, %v1307
        %v1309 = vpop.f32.mrb[0].mxu0
        %v1310 = vadd.f32 %v1080, %v1309
        %v1311 = vpop.f32.mrb[0].mxu0
        %v1312 = vadd.f32 %v1076, %v1311
        %v1313 = vpop.f32.mrb[0].mxu0
        %v1314 = vadd.f32 %v1080, %v1313
        %1315 = vdwg.mxu0
        %v1316 = vmax.f32 %v1278, 0.0
        %v1317 = vmax.f32 %v1280, 0.0
        %v1318 = vmax.f32 %v1282, 0.0
        %v1319 = vmax.f32 %v1284, 0.0
        %v1320 = vmax.f32 %v1288, 0.0
        %v1321 = vmax.f32 %v1290, 0.0
        %v1322 = vmax.f32 %v1292, 0.0
        %v1323 = vmax.f32 %v1294, 0.0
        %v1324 = vmax.f32 %v1298, 0.0
        %v1325 = vmax.f32 %v1300, 0.0
        %v1326 = vmax.f32 %v1302, 0.0
        %v1327 = vmax.f32 %v1304, 0.0
        %v1328 = vmax.f32 %v1308, 0.0
        %v1329 = vmax.f32 %v1310, 0.0
        %v1330 = vmax.f32 %v1312, 0.0
        %v1331 = vmax.f32 %v1314, 0.0
        %v1332 = vpack.c.bf16 %v1318, %v1316
        %v1333 = vpack.c.bf16 %v1319, %v1317
        %v1334 = vpack.c.bf16 %v1322, %v1320
        %v1335 = vpack.c.bf16 %v1323, %v1321
        %v1336 = vpack.c.bf16 %v1326, %v1324
        %v1337 = vpack.c.bf16 %v1327, %v1325
        %v1338 = vpack.c.bf16 %v1330, %v1328
        %v1339 = vpack.c.bf16 %v1331, %v1329
        %v1340 = vld [vmem:[%s504] sm:$0xf]
        %v1341 = vld [vmem:[%s504 + $0x4] sm:$0xf]
        %v1342 = vld [vmem:[%s504 + $0x8] sm:$0xf]
        %v1343 = vld [vmem:[%s504 + $0xc] sm:$0xf]
        %v1344 = vld [vmem:[%s504 + $0x10] sm:$0xf]
        %v1345 = vld [vmem:[%s504 + $0x14] sm:$0xf]
        %v1346 = vld [vmem:[%s504 + $0x18] sm:$0xf]
        %v1347 = vld [vmem:[%s504 + $0x1c] sm:$0xf]
        %v1348 = vld [vmem:[%s504 + $0x20] sm:$0xf]
        %v1349 = vld [vmem:[%s504 + $0x24] sm:$0xf]
        %v1350 = vld [vmem:[%s504 + $0x28] sm:$0xf]
        %v1351 = vld [vmem:[%s504 + $0x2c] sm:$0xf]
        %v1352 = vld [vmem:[%s504 + $0x30] sm:$0xf]
        %v1353 = vld [vmem:[%s504 + $0x34] sm:$0xf]
        %v1354 = vld [vmem:[%s504 + $0x38] sm:$0xf]
        %v1355 = vld [vmem:[%s504 + $0x3c] sm:$0xf]
        %v1356 = vld [vmem:[%s504 + $0x40] sm:$0xf]
        %v1357 = vld [vmem:[%s504 + $0x44] sm:$0xf]
        %v1358 = vld [vmem:[%s504 + $0x48] sm:$0xf]
        %v1359 = vld [vmem:[%s504 + $0x4c] sm:$0xf]
        %v1360 = vld [vmem:[%s504 + $0x50] sm:$0xf]
        %v1361 = vld [vmem:[%s504 + $0x54] sm:$0xf]
        %v1362 = vld [vmem:[%s504 + $0x58] sm:$0xf]
        %v1363 = vld [vmem:[%s504 + $0x5c] sm:$0xf]
        %v1364 = vld [vmem:[%s504 + $0x60] sm:$0xf]
        %v1365 = vld [vmem:[%s504 + $0x64] sm:$0xf]
        %v1366 = vld [vmem:[%s504 + $0x68] sm:$0xf]
        %v1367 = vld [vmem:[%s504 + $0x6c] sm:$0xf]
        %v1368 = vld [vmem:[%s504 + $0x70] sm:$0xf]
        %v1369 = vld [vmem:[%s504 + $0x74] sm:$0xf]
        %v1370 = vld [vmem:[%s504 + $0x78] sm:$0xf]
        %v1371 = vld [vmem:[%s504 + $0x7c] sm:$0xf]
        %v1372 = vld [vmem:[%s632] sm:$0x1]
        %v1374 = vlaneseq
        %v1375 = vshrl.u32 %v1374, 7
        %v1376 = vsub.s32 0, %v1375
        %v1377 = vrot.slane %v1372, %v1376
        %v1411 = vunpack.c.l.b16 %v1340
        %v1412 = vunpack.c.l.b16 %v1341
        %v1413 = vunpack.c.l.b16 %v1342
        %v1414 = vunpack.c.l.b16 %v1343
        %v1415 = vunpack.c.l.b16 %v1344
        %v1416 = vunpack.c.l.b16 %v1345
        %v1417 = vunpack.c.l.b16 %v1346
        %v1418 = vunpack.c.l.b16 %v1347
        %v1419 = vunpack.c.l.b16 %v1348
        %v1420 = vunpack.c.l.b16 %v1349
        %v1421 = vunpack.c.l.b16 %v1350
        %v1422 = vunpack.c.l.b16 %v1351
        %v1423 = vunpack.c.l.b16 %v1352
        %v1424 = vunpack.c.l.b16 %v1353
        %v1425 = vunpack.c.l.b16 %v1354
        %v1426 = vunpack.c.l.b16 %v1355
        %v1427 = vunpack.c.l.b16 %v1356
        %v1428 = vunpack.c.l.b16 %v1357
        %v1429 = vunpack.c.l.b16 %v1358
        %v1430 = vunpack.c.l.b16 %v1359
        %v1431 = vunpack.c.l.b16 %v1360
        %v1432 = vunpack.c.l.b16 %v1361
        %v1433 = vunpack.c.l.b16 %v1362
        %v1434 = vunpack.c.l.b16 %v1363
        %v1435 = vunpack.c.l.b16 %v1364
        %v1436 = vunpack.c.l.b16 %v1365
        %v1437 = vunpack.c.l.b16 %v1366
        %v1438 = vunpack.c.l.b16 %v1367
        %v1439 = vunpack.c.l.b16 %v1368
        %v1440 = vunpack.c.l.b16 %v1369
        %v1441 = vunpack.c.l.b16 %v1370
        %v1442 = vunpack.c.l.b16 %v1371
        %v1443 = vpack.c.b16 %v1412, %v1411
        %v1444 = vpack.c.b16 %v1414, %v1413
        %v1445 = vpack.c.b16 %v1416, %v1415
        %v1446 = vpack.c.b16 %v1418, %v1417
        %v1447 = vpack.c.b16 %v1420, %v1419
        %v1448 = vpack.c.b16 %v1422, %v1421
        %v1449 = vpack.c.b16 %v1424, %v1423
        %v1450 = vpack.c.b16 %v1426, %v1425
        %v1451 = vpack.c.b16 %v1428, %v1427
        %v1452 = vpack.c.b16 %v1430, %v1429
        %v1453 = vpack.c.b16 %v1432, %v1431
        %v1454 = vpack.c.b16 %v1434, %v1433
        %v1455 = vpack.c.b16 %v1436, %v1435
        %v1456 = vpack.c.b16 %v1438, %v1437
        %v1457 = vpack.c.b16 %v1440, %v1439
        %v1458 = vpack.c.b16 %v1442, %v1441
        %1475 = vmatprep.subr.bf16.mxu0 0
        %1476 = vmatpush1.bf16.msra.mxu0 %v1443
        %1477 = vmatprep.subr.bf16.mxu0 0
        %1478 = vmatpush1.bf16.msra.mxu0 %v1444
        %1479 = vmatprep.subr.bf16.mxu0 0
        %1480 = vmatpush1.bf16.msra.mxu0 %v1445
        %1481 = vmatprep.subr.bf16.mxu0 0
        %1482 = vmatpush1.bf16.msra.mxu0 %v1446
        %1483 = vmatprep.subr.bf16.mxu0 0
        %1484 = vmatpush1.bf16.msra.mxu0 %v1447
        %1485 = vmatprep.subr.bf16.mxu0 0
        %1486 = vmatpush1.bf16.msra.mxu0 %v1448
        %1487 = vmatprep.subr.bf16.mxu0 0
        %1488 = vmatpush1.bf16.msra.mxu0 %v1449
        %1489 = vmatprep.subr.bf16.mxu0 0
        %1490 = vmatpush1.bf16.msra.mxu0 %v1450
        %1491 = vmatprep.subr.bf16.mxu0 0
        %1492 = vmatpush1.bf16.msra.mxu0 %v1451
        %1493 = vmatprep.subr.bf16.mxu0 0
        %1494 = vmatpush1.bf16.msra.mxu0 %v1452
        %1495 = vmatprep.subr.bf16.mxu0 0
        %1496 = vmatpush1.bf16.msra.mxu0 %v1453
        %1497 = vmatprep.subr.bf16.mxu0 0
        %1498 = vmatpush1.bf16.msra.mxu0 %v1454
        %1499 = vmatprep.subr.bf16.mxu0 0
        %1500 = vmatpush1.bf16.msra.mxu0 %v1455
        %1501 = vmatprep.subr.bf16.mxu0 0
        %1502 = vmatpush1.bf16.msra.mxu0 %v1456
        %1503 = vmatprep.subr.bf16.mxu0 0
        %1504 = vmatpush1.bf16.msra.mxu0 %v1457
        %1505 = vmatprep.subr.bf16.mxu0 0
        %1506 = vmatpush1.bf16.msra.mxu0 %v1458
        %1507 = vmatprep.mubr.bf16.mxu0 %v1333
        %1508 = vmatmul.mubr.bf16.gmra.mrb[0].mxu0 %v1332
        %v1509 = vpop.f32.mrb[0].mxu0
        %v1510 = vadd.f32 %v1377, %v1509
        %v1511 = vpop.f32.mrb[0].mxu0
        %v1512 = vpop.f32.mrb[0].mxu0
        %v1513 = vadd.f32 %v1377, %v1512
        %v1514 = vpop.f32.mrb[0].mxu0
        %1515 = vmatprep.mubr.bf16.mxu0 %v1335
        %1516 = vmatmul.mubr.bf16.gmra.mrb[0].mxu0 %v1334
        %v1517 = vpop.f32.mrb[0].mxu0
        %v1518 = vadd.f32 %v1377, %v1517
        %v1519 = vpop.f32.mrb[0].mxu0
        %v1520 = vpop.f32.mrb[0].mxu0
        %v1521 = vadd.f32 %v1377, %v1520
        %v1522 = vpop.f32.mrb[0].mxu0
        %1523 = vmatprep.mubr.bf16.mxu0 %v1337
        %1524 = vmatmul.mubr.bf16.gmra.mrb[0].mxu0 %v1336
        %v1525 = vpop.f32.mrb[0].mxu0
        %v1526 = vadd.f32 %v1377, %v1525
        %v1527 = vpop.f32.mrb[0].mxu0
        %v1528 = vpop.f32.mrb[0].mxu0
        %v1529 = vadd.f32 %v1377, %v1528
        %v1530 = vpop.f32.mrb[0].mxu0
        %1531 = vmatprep.mubr.bf16.mxu0 %v1339
        %1532 = vmatmul.mubr.bf16.gmra.mrb[0].mxu0 %v1338
        %v1533 = vpop.f32.mrb[0].mxu0
        %v1534 = vadd.f32 %v1377, %v1533
        %v1535 = vpop.f32.mrb[0].mxu0
        %v1536 = vpop.f32.mrb[0].mxu0
        %v1537 = vadd.f32 %v1377, %v1536
        %v1538 = vpop.f32.mrb[0].mxu0
        %1539 = vdwg.mxu0
        %1540 = vst [vmem:[%s588] sm:$0xff] %v1510
        %1541 = vst [vmem:[%s588 + $0x8] sm:$0xff] %v1513
        %1542 = vst [vmem:[%s588 + $0x10] sm:$0xff] %v1518
        %1543 = vst [vmem:[%s588 + $0x18] sm:$0xff] %v1521
        %1544 = vst [vmem:[%s588 + $0x20] sm:$0xff] %v1526
        %1545 = vst [vmem:[%s588 + $0x28] sm:$0xff] %v1529
        %1546 = vst [vmem:[%s588 + $0x30] sm:$0xff] %v1534
        %1547 = vst [vmem:[%s588 + $0x38] sm:$0xff] %v1537
        %s1548 = sand.u32 %s339, 1
        %s1549 = scalar_lea.sflag [#allocation4], %s1548
        %s1550 = sand.u32 %s339, 1
        %s1551 = smul.addr %s1550, 64
        %s1552 = scalar_lea.vmem [#allocation7], %s1551
        // Predicated region
        $region73: #{tpu_custom_call.1} parent=63 // pred_check
          %p1553 = pneg %p349
        $region74: #{tpu_custom_call.1} parent=63 // pred_check_branch
          %1555 = sbr.rel (%p1553) target = $region76
        $region75: #{tpu_custom_call.1} parent=63 // pred_region
          %s1556 = smul.u32 8, %s36
          %s1558 = ssub.s32 1024, 1024
          %1559 = vsyncadd %s1549, %s1558
          %s1560 = smul.addr %s35, 8
          %s1561 = sadd.s32 %s1556, %s1560
          %s1562 = smul.addr %s1561, 128
          %s1563 = scalar_lea.hbm %s11, %s1562
          %s1564 = sshll.u32 %s1552, 4
          %s1565 = int_to_ptr.vmem [resolvable:$true] %s1564
          %1570 = dma.vmem_to_hbm [thread:$0]  %s1565, 1024, %s1563, %s1549, 128, 128, 8
        $region76: #{tpu_custom_call.1} parent=63 // pred_fallthru
          _
      $region64: #{tpu_custom_call.1} parent=5 // pred_fallthru
        _
      %p1571 = scmp.le.s32.totalorder 2, %s26
      // Predicated region
      $region77: #{tpu_custom_call.1} parent=5 // pred_check
        %p1572 = pneg %p1571
      $region78: #{tpu_custom_call.1} parent=5 // pred_check_branch
        %1574 = sbr.rel (%p1572) target = $region80
      $region79: #{tpu_custom_call.1} parent=5 // pred_region
        %s1575 = ssub.s32 %s26, 2
        // Predicated region
        $region81: #{tpu_custom_call.1} parent=79 // pred_check
          %p1576 = pneg %p355
        $region82: #{tpu_custom_call.1} parent=79 // pred_check_branch
          %1578 = sbr.rel (%p1576) target = $region84
        $region83: #{tpu_custom_call.1} parent=79 // pred_region
          %s1579 = sand.u32 %s340, 1
          %s1580 = scalar_lea.sflag [#allocation4], %s1579
          %s1581 = sand.u32 %s340, 1
          %s1582 = smul.addr %s1581, 64
          %s1583 = scalar_lea.vmem [#allocation7], %s1582
          %1584 = dma.done %s1580, 1024
        $region84: #{tpu_custom_call.1} parent=79 // pred_fallthru
          _
      $region80: #{tpu_custom_call.1} parent=5 // pred_fallthru
        _
    $region6: #{tpu_custom_call.1} parent=1 // loop_footer
      %s30 = sadd.s32 1, %s26
    $region7: #{tpu_custom_call.1} parent=1 // loop_footer_branch
      %25 = sbr.rel target = $region3
    $region8: #{tpu_custom_call.1} parent=1 // loop_exit
      _
    %1585 = vsyncpa [#allocation3], 1
    %s1586 = scalar_lea.sflag [#allocation3], 1
    %1587 = vsyncpa %s1586, 1
    %1588 = vsyncpa [#allocation6], 1
    %s1589 = scalar_lea.sflag [#allocation6], 1
    %1590 = vsyncpa %s1589, 1
    %1591 = vsyncpa [#allocation4], 1
    %s1592 = scalar_lea.sflag [#allocation4], 1
    %1593 = vsyncpa %s1592, 1

</llo_original>
